<compile_context>
chip_gen: v7x
topology: tpu7x:2x2x1
jax: 0.10.0
libtpu: 0.0.40
codegen_flags: <defaults>
</compile_context>

<pallas_src>
import functools

import jax
import jax.numpy as jnp
from jax import lax
from jax.experimental import pallas as pl
from jax.experimental.pallas import tpu as pltpu

NUM_HEADS = 8
LN_EPS = 1e-5                                  # torch.nn.LayerNorm default
TILE_VMEM_BUDGET_BYTES = 28 * 1024 * 1024      # per-tile working-set budget
VMEM_LIMIT_BYTES = 48 * 1024 * 1024            # < 64 MiB/core (v7x), > v5e's 16 MiB default


def positional_encoding(d_model, max_len=50):
    position = jnp.arange(max_len, dtype=jnp.float32)[:, None]
    div_term = jnp.exp(
        jnp.arange(0, d_model, 2, dtype=jnp.float32) * (-jnp.log(10000.0) / d_model)
    )
    pe = jnp.zeros((max_len, d_model), jnp.float32)
    pe = pe.at[:, 0::2].set(jnp.sin(position * div_term))
    pe = pe.at[:, 1::2].set(jnp.cos(position * div_term))
    return pe  # (max_len, d_model)


def _mha_pos_kernel(x_ref, w_ref, o_ref, *, seq_len):
    """One batch tile: K/V projection over all S positions, Q projection for
    position 0 only, per-head softmax over positions, weighted value sum,
    output projection and LayerNorm."""
    S = seq_len
    TB = x_ref.shape[1]
    C = x_ref.shape[2]

    # Row offsets inside the packed weight block (must match wrapper packing).
    r_wq, r_wk, r_wv, r_mask, r_wo = 0, C, 2 * C, 3 * C, 4 * C
    r_bq = 5 * C
    r_bk = 5 * C + 1
    r_bv = 5 * C + 1 + S
    r_bo = 5 * C + 1 + 2 * S
    r_gamma = 5 * C + 2 + 2 * S
    r_beta = 5 * C + 3 + 2 * S

    # (S, TB, C) -> (S*TB, C): free leading-dim collapse (TB is a multiple of 8).
    x2 = x_ref[...].reshape(S * TB, C)

    # ---- K / V projections over all S positions (PE folded into the bias) ----
    k3 = jnp.dot(x2, w_ref[r_wk:r_wk + C, :],
                 preferred_element_type=jnp.float32).reshape(S, TB, C)
    k3 = k3 + w_ref[r_bk:r_bk + S, :][:, None, :]
    v3 = jnp.dot(x2, w_ref[r_wv:r_wv + C, :],
                 preferred_element_type=jnp.float32).reshape(S, TB, C)
    v3 = v3 + w_ref[r_bv:r_bv + S, :][:, None, :]

    # ---- Q projection: query position 0 only (1/sqrt(D) baked into Wq/bq) ----
    q0 = jnp.dot(x2[:TB, :], w_ref[r_wq:r_wq + C, :],
                 preferred_element_type=jnp.float32) + w_ref[r_bq:r_bq + 1, :]

    # ---- per-head scores replicated over each head's channels ----------------
    # head_mask[d, c] = 1 iff head(d) == head(c), so scores[., c] = sum over
    # head(c)'s channels of q*k -> softmax / weighted-sum stay plain VPU work.
    # TODO(synk): for C >= 128 swap this O(C^2) MXU matmul for a (S*TB, H, D)
    # minor-axis sum + broadcast; kept here because the MXU has slack at small C.
    qk = (k3 * q0[None, :, :]).reshape(S * TB, C)
    scores = jnp.dot(qk, w_ref[r_mask:r_mask + C, :],
                     preferred_element_type=jnp.float32).reshape(S, TB, C)

    # ---- softmax over the S key positions (leading axis -> VPU/EUP) ----------
    # Exact divide (not pl.reciprocal(approx=True)) so the 1e-4 tolerance holds.
    m = jnp.max(scores, axis=0, keepdims=True)
    e = jnp.exp(scores - m)
    p = e / jnp.sum(e, axis=0, keepdims=True)

    # ---- weighted value sum + output projection + LayerNorm ------------------
    attn = jnp.sum(p * v3, axis=0)                                    # (TB, C)
    y = jnp.dot(attn, w_ref[r_wo:r_wo + C, :],
                preferred_element_type=jnp.float32) + w_ref[r_bo:r_bo + 1, :]
    mean = jnp.mean(y, axis=-1, keepdims=True)
    var = jnp.mean((y - mean) ** 2, axis=-1, keepdims=True)
    y_n = (y - mean) * lax.rsqrt(var + LN_EPS)
    # TODO(synk): lane-dense (TB*C/128, 128) store for C < 128 skipped: the
    # in-kernel (TB,C)->(.,128) relayout would outweigh the masked-vst savings
    # at this tile size; revisit with a bundle dump for large-B configs.
    o_ref[...] = (y_n * w_ref[r_gamma:r_gamma + 1, :]
                  + w_ref[r_beta:r_beta + 1, :]).astype(o_ref.dtype)


def _tile_vmem_bytes(tb, seq, chan):
    """Conservative per-grid-step VMEM estimate (f32)."""
    f32 = 4
    w_rows = 5 * chan + 2 * seq + 4
    x_in = 2 * seq * tb * chan * f32          # double-buffered streamed input slab
    wts = w_rows * chan * f32                 # packed weights (single-buffered)
    out = 2 * tb * chan * f32                 # double-buffered output tile
    interm = 9 * seq * tb * chan * f32        # x2, k3, v3, qk, scores, e, p + slack
    return x_in + wts + out + interm


def _choose_tb(batch, seq, chan, budget_bytes):
    """Largest multiple-of-8 batch tile dividing B that fits the VMEM budget.
    Single-TC chips (v5e/v6e) want the biggest tile (the grid is a serial loop);
    when tiling is forced anyway, prefer an even block count (v7x megacore)."""
    cands = [tb for tb in range(8, batch + 1, 8) if batch % tb == 0]
    if not cands:
        return batch                          # tiny / indivisible batch: one block
    fitting = [tb for tb in cands if _tile_vmem_bytes(tb, seq, chan) <= budget_bytes]
    if not fitting:
        return min(cands)
    best = max(fitting)
    if batch // best > 1:
        even = [tb for tb in fitting if (batch // tb) % 2 == 0]
        if even:
            best = max(even)
    return best


def _build_pallas_call(B, S, C, TB, w_rows, *, single_buffer_weights):
    kernel = functools.partial(_mha_pos_kernel, seq_len=S)
    w_spec_kwargs = {}
    if single_buffer_weights:
        # Grid-invariant operand: fetched once, so one buffer instead of two.
        w_spec_kwargs["pipeline_mode"] = pl.Buffered(1)
    in_specs = [
        pl.BlockSpec((S, TB, C), lambda i: (0, i, 0)),         # stacked features
        pl.BlockSpec((w_rows, C), lambda i: (0, 0), **w_spec_kwargs),
    ]
    return pl.pallas_call(
        kernel,
        out_shape=jax.ShapeDtypeStruct((B, C), jnp.float32),
        grid_spec=pltpu.PrefetchScalarGridSpec(
            num_scalar_prefetch=0,
            grid=(B // TB,),
            in_specs=in_specs,
            out_specs=pl.BlockSpec((TB, C), lambda i: (i, 0)),
        ),
        compiler_params=pltpu.CompilerParams(
            dimension_semantics=("parallel",),
            vmem_limit_bytes=VMEM_LIMIT_BYTES),
    )


def self_attention_with_position(features, params, *, num_heads=NUM_HEADS):
    NT, V, C = features[0].shape
    S = len(features)
    B = NT * V
    assert C % num_heads == 0, "feature_dim must be divisible by num_heads"
    D = C // num_heads
    scale = 1.0 / float(D) ** 0.5

    # One stacked activation slab -> a single DMA per grid step.
    x = jnp.stack([f.reshape(B, C) for f in features], axis=0).astype(jnp.float32)

    # Positional encoding folded into per-position projection biases.
    pe = params["pe"][:S]                                            # (S, C)
    w_q = params["wq"].T * scale                                     # scale baked in
    w_k = params["wk"].T
    w_v = params["wv"].T
    b_q = pe[0:1] @ w_q + params["bq"][None, :] * scale              # (1, C)
    b_k = pe @ w_k + params["bk"][None, :]                           # (S, C)
    b_v = pe @ w_v + params["bv"][None, :]                           # (S, C)

    # Head-block mask: M[d, c] = 1 iff head(d) == head(c).
    head_of = jnp.arange(C, dtype=jnp.int32) // D
    head_mask = (head_of[:, None] == head_of[None, :]).astype(jnp.float32)

    # All small operands packed into one VMEM block (one DMA, single-buffered).
    wpack = jnp.concatenate(
        [w_q, w_k, w_v, head_mask, params["wo"].T,
         b_q, b_k, b_v,
         params["bo"][None, :], params["gamma"][None, :], params["beta"][None, :]],
        axis=0).astype(jnp.float32)
    w_rows = 5 * C + 2 * S + 4
    assert wpack.shape == (w_rows, C), wpack.shape

    TB = _choose_tb(B, S, C, TILE_VMEM_BUDGET_BYTES)
    assert B % TB == 0

    out = None
    for single_buf in (True, False):
        try:
            call = _build_pallas_call(B, S, C, TB, w_rows,
                                      single_buffer_weights=single_buf)
            out = jax.block_until_ready(call(x, wpack))
            break
        except Exception:
            if not single_buf:               # already on the safe fallback
                raise
    return out.reshape(NT, V, C)


def init_params(key, feature_dim, max_len=50):
    C = feature_dim
    ks = jax.random.split(key, 10)
    scale = 1.0 / jnp.sqrt(jnp.float32(C))
    params = {
        "wq": jax.random.normal(ks[0], (C, C), jnp.float32) * scale,
        "wk": jax.random.normal(ks[1], (C, C), jnp.float32) * scale,
        "wv": jax.random.normal(ks[2], (C, C), jnp.float32) * scale,
        "wo": jax.random.normal(ks[3], (C, C), jnp.float32) * scale,
        "bq": jax.random.normal(ks[4], (C,), jnp.float32) * 0.02,
        "bk": jax.random.normal(ks[5], (C,), jnp.float32) * 0.02,
        "bv": jax.random.normal(ks[6], (C,), jnp.float32) * 0.02,
        "bo": jax.random.normal(ks[7], (C,), jnp.float32) * 0.02,
        "gamma": 1.0 + 0.1 * jax.random.normal(ks[8], (C,), jnp.float32),
        "beta": 0.1 * jax.random.normal(ks[9], (C,), jnp.float32),
        "pe": positional_encoding(C, max_len),
    }
    return params


def reference(features, params):
    """Pure-JAX mirror of the PyTorch forward pass (for validation)."""
    NT, V, C = features[0].shape
    B = NT * V
    S = len(features)
    H = NUM_HEADS
    D = C // H
    x = jnp.stack([f.reshape(B, C) for f in features], axis=1)  # (B, S, C)
    x = x + params["pe"][:S][None]
    q = x @ params["wq"].T + params["bq"]
    k = x @ params["wk"].T + params["bk"]
    v = x @ params["wv"].T + params["bv"]

    def split(t):
        return t.reshape(B, S, H, D).transpose(0, 2, 1, 3)

    qh, kh, vh = split(q), split(k), split(v)
    s = jnp.einsum("bhsd,bhtd->bhst", qh, kh) / jnp.sqrt(jnp.float32(D))
    p = jax.nn.softmax(s, axis=-1)
    o = jnp.einsum("bhst,bhtd->bhsd", p, vh).transpose(0, 2, 1, 3).reshape(B, S, C)
    y = o @ params["wo"].T + params["bo"]
    mean = y.mean(-1, keepdims=True)
    var = ((y - mean) ** 2).mean(-1, keepdims=True)
    yn = (y - mean) / jnp.sqrt(var + LN_EPS) * params["gamma"] + params["beta"]
    return yn[:, 0, :].reshape(NT, V, C)


if __name__ == "__main__":
    # feature_dim=32 (divisible by 8 heads), feature_num=4, B = NT*V = 16.
    # The VMEM-aware tiler picks a single (B-sized) tile here: one grid step on
    # single-TC chips (v5e/v6e) instead of paying fixed per-step overhead twice.
    NT, V, C, S = 2, 8, 32, 4
    key = jax.random.PRNGKey(0)
    k_feat, k_param = jax.random.split(key)
    feat_keys = jax.random.split(k_feat, S)
    features = [jax.random.normal(k, (NT, V, C), jnp.float32) for k in feat_keys]
    params = init_params(k_param, C)

    out = self_attention_with_position(features, params)
    out = jax.block_until_ready(out)

    ref = reference(features, params)
    assert out.shape == (NT, V, C), out.shape
    err = jnp.max(jnp.abs(out - ref))
    if not bool(jnp.allclose(out, ref, atol=1e-4, rtol=1e-4)):
        raise AssertionError(f"kernel/reference mismatch, max abs err = {err}")
    print("KERNEL_OK")
</pallas_src>

<mosaic_0001>
module attributes {stable_mosaic.version = 11 : i64} {
  func.func @_mha_pos_kernel(%arg0: i32, %arg1: memref<4x16x32xf32, #tpu.memory_space<vmem>>, %arg2: memref<172x32xf32, #tpu.memory_space<vmem>>, %arg3: memref<16x32xf32, #tpu.memory_space<vmem>>) attributes {dimension_semantics = [#tpu.dimension_semantics<parallel>], iteration_bounds = array<i64: 1>, scalar_prefetch = 0 : i64, scratch_operands = 0 : i64, tpu.core_type = #tpu.core_type<tc>, window_params = [{transform_indices = @transform_0, window_bounds = array<i64: 4, 16, 32>}, {pipeline_mode = #tpu.pipeline_mode<synchronous>, transform_indices = @transform_1, window_bounds = array<i64: 172, 32>}, {transform_indices = @transform_2, window_bounds = array<i64: 16, 32>}]} {
    %c0 = arith.constant 0 : index
    %c0_0 = arith.constant 0 : index
    %c0_1 = arith.constant 0 : index
    %0 = vector.load %arg1[%c0, %c0_0, %c0_1] : memref<4x16x32xf32, #tpu.memory_space<vmem>>, vector<4x16x32xf32>
    %1 = vector.shape_cast %0 : vector<4x16x32xf32> to vector<64x32xf32>
    %c32 = arith.constant 32 : index
    %c0_2 = arith.constant 0 : index
    %2 = vector.load %arg2[%c32, %c0_2] : memref<172x32xf32, #tpu.memory_space<vmem>>, vector<32x32xf32>
    %cst = arith.constant dense<0.000000e+00> : vector<64x32xf32>
    %3 = tpu.matmul %1, %2, %cst {dimension_numbers = #tpu.dot_dimension_numbers<[1], [0], [0], [1], [0, 0, 1, 1], [], []>} : vector<64x32xf32>, vector<32x32xf32>, vector<64x32xf32> -> vector<64x32xf32>
    %4 = vector.shape_cast %3 : vector<64x32xf32> to vector<4x16x32xf32>
    %c161 = arith.constant 161 : index
    %c0_3 = arith.constant 0 : index
    %5 = vector.load %arg2[%c161, %c0_3] : memref<172x32xf32, #tpu.memory_space<vmem>>, vector<4x32xf32>
    %6 = vector.shape_cast %5 : vector<4x32xf32> to vector<4x1x32xf32>
    %7 = vector.broadcast %6 : vector<4x1x32xf32> to vector<4x16x32xf32>
    %8 = arith.addf %4, %7 : vector<4x16x32xf32>
    %c64 = arith.constant 64 : index
    %c0_4 = arith.constant 0 : index
    %9 = vector.load %arg2[%c64, %c0_4] : memref<172x32xf32, #tpu.memory_space<vmem>>, vector<32x32xf32>
    %cst_5 = arith.constant dense<0.000000e+00> : vector<64x32xf32>
    %10 = tpu.matmul %1, %9, %cst_5 {dimension_numbers = #tpu.dot_dimension_numbers<[1], [0], [0], [1], [0, 0, 1, 1], [], []>} : vector<64x32xf32>, vector<32x32xf32>, vector<64x32xf32> -> vector<64x32xf32>
    %11 = vector.shape_cast %10 : vector<64x32xf32> to vector<4x16x32xf32>
    %c165 = arith.constant 165 : index
    %c0_6 = arith.constant 0 : index
    %12 = vector.load %arg2[%c165, %c0_6] : memref<172x32xf32, #tpu.memory_space<vmem>>, vector<4x32xf32>
    %13 = vector.shape_cast %12 : vector<4x32xf32> to vector<4x1x32xf32>
    %14 = vector.broadcast %13 : vector<4x1x32xf32> to vector<4x16x32xf32>
    %15 = arith.addf %11, %14 : vector<4x16x32xf32>
    %16 = vector.extract_strided_slice %1 {offsets = [0, 0], sizes = [16, 32], strides = [1, 1]} : vector<64x32xf32> to vector<16x32xf32>
    %c0_7 = arith.constant 0 : index
    %c0_8 = arith.constant 0 : index
    %17 = vector.load %arg2[%c0_7, %c0_8] : memref<172x32xf32, #tpu.memory_space<vmem>>, vector<32x32xf32>
    %cst_9 = arith.constant dense<0.000000e+00> : vector<16x32xf32>
    %18 = tpu.matmul %16, %17, %cst_9 {dimension_numbers = #tpu.dot_dimension_numbers<[1], [0], [0], [1], [0, 0, 1, 1], [], []>} : vector<16x32xf32>, vector<32x32xf32>, vector<16x32xf32> -> vector<16x32xf32>
    %c160 = arith.constant 160 : index
    %c0_10 = arith.constant 0 : index
    %19 = vector.load %arg2[%c160, %c0_10] : memref<172x32xf32, #tpu.memory_space<vmem>>, vector<1x32xf32>
    %20 = vector.broadcast %19 : vector<1x32xf32> to vector<16x32xf32>
    %21 = arith.addf %18, %20 : vector<16x32xf32>
    %22 = vector.shape_cast %21 : vector<16x32xf32> to vector<1x16x32xf32>
    %23 = vector.broadcast %22 : vector<1x16x32xf32> to vector<4x16x32xf32>
    %24 = arith.mulf %8, %23 : vector<4x16x32xf32>
    %25 = vector.shape_cast %24 : vector<4x16x32xf32> to vector<64x32xf32>
    %c96 = arith.constant 96 : index
    %c0_11 = arith.constant 0 : index
    %26 = vector.load %arg2[%c96, %c0_11] : memref<172x32xf32, #tpu.memory_space<vmem>>, vector<32x32xf32>
    %cst_12 = arith.constant dense<0.000000e+00> : vector<64x32xf32>
    %27 = tpu.matmul %25, %26, %cst_12 {dimension_numbers = #tpu.dot_dimension_numbers<[1], [0], [0], [1], [0, 0, 1, 1], [], []>} : vector<64x32xf32>, vector<32x32xf32>, vector<64x32xf32> -> vector<64x32xf32>
    %28 = vector.shape_cast %27 : vector<64x32xf32> to vector<4x16x32xf32>
    %cst_13 = arith.constant dense<0xFF800000> : vector<16x32xf32>
    %29 = vector.multi_reduction <maximumf>, %28, %cst_13 [0] : vector<4x16x32xf32> to vector<16x32xf32>
    %30 = vector.shape_cast %29 : vector<16x32xf32> to vector<1x16x32xf32>
    %31 = vector.broadcast %30 : vector<1x16x32xf32> to vector<4x16x32xf32>
    %32 = arith.subf %28, %31 : vector<4x16x32xf32>
    %33 = math.exp %32 : vector<4x16x32xf32>
    %cst_14 = arith.constant dense<0.000000e+00> : vector<16x32xf32>
    %34 = vector.multi_reduction <add>, %33, %cst_14 [0] : vector<4x16x32xf32> to vector<16x32xf32>
    %35 = vector.shape_cast %34 : vector<16x32xf32> to vector<1x16x32xf32>
    %36 = vector.broadcast %35 : vector<1x16x32xf32> to vector<4x16x32xf32>
    %37 = arith.divf %33, %36 : vector<4x16x32xf32>
    %38 = arith.mulf %37, %15 : vector<4x16x32xf32>
    %cst_15 = arith.constant dense<0.000000e+00> : vector<16x32xf32>
    %39 = vector.multi_reduction <add>, %38, %cst_15 [0] : vector<4x16x32xf32> to vector<16x32xf32>
    %c128 = arith.constant 128 : index
    %c0_16 = arith.constant 0 : index
    %40 = vector.load %arg2[%c128, %c0_16] : memref<172x32xf32, #tpu.memory_space<vmem>>, vector<32x32xf32>
    %cst_17 = arith.constant dense<0.000000e+00> : vector<16x32xf32>
    %41 = tpu.matmul %39, %40, %cst_17 {dimension_numbers = #tpu.dot_dimension_numbers<[1], [0], [0], [1], [0, 0, 1, 1], [], []>} : vector<16x32xf32>, vector<32x32xf32>, vector<16x32xf32> -> vector<16x32xf32>
    %c169 = arith.constant 169 : index
    %c0_18 = arith.constant 0 : index
    %42 = vector.load %arg2[%c169, %c0_18] : memref<172x32xf32, #tpu.memory_space<vmem>>, vector<1x32xf32>
    %43 = vector.broadcast %42 : vector<1x32xf32> to vector<16x32xf32>
    %44 = arith.addf %41, %43 : vector<16x32xf32>
    %cst_19 = arith.constant dense<0.000000e+00> : vector<16xf32>
    %45 = vector.multi_reduction <add>, %44, %cst_19 [1] : vector<16x32xf32> to vector<16xf32>
    %46 = vector.shape_cast %45 : vector<16xf32> to vector<16x1xf32>
    %cst_20 = arith.constant 3.200000e+01 : f32
    %47 = vector.broadcast %cst_20 : f32 to vector<16x1xf32>
    %48 = arith.divf %46, %47 : vector<16x1xf32>
    %49 = vector.broadcast %48 : vector<16x1xf32> to vector<16x32xf32>
    %50 = arith.subf %44, %49 : vector<16x32xf32>
    %51 = arith.mulf %50, %50 : vector<16x32xf32>
    %cst_21 = arith.constant dense<0.000000e+00> : vector<16xf32>
    %52 = vector.multi_reduction <add>, %51, %cst_21 [1] : vector<16x32xf32> to vector<16xf32>
    %53 = vector.shape_cast %52 : vector<16xf32> to vector<16x1xf32>
    %cst_22 = arith.constant 3.200000e+01 : f32
    %54 = vector.broadcast %cst_22 : f32 to vector<16x1xf32>
    %55 = arith.divf %53, %54 : vector<16x1xf32>
    %56 = vector.broadcast %48 : vector<16x1xf32> to vector<16x32xf32>
    %57 = arith.subf %44, %56 : vector<16x32xf32>
    %cst_23 = arith.constant 9.99999974E-6 : f32
    %58 = vector.broadcast %cst_23 : f32 to vector<16x1xf32>
    %59 = arith.addf %55, %58 : vector<16x1xf32>
    %60 = math.rsqrt %59 : vector<16x1xf32>
    %61 = vector.broadcast %60 : vector<16x1xf32> to vector<16x32xf32>
    %62 = arith.mulf %57, %61 : vector<16x32xf32>
    %c170 = arith.constant 170 : index
    %c0_24 = arith.constant 0 : index
    %63 = vector.load %arg2[%c170, %c0_24] : memref<172x32xf32, #tpu.memory_space<vmem>>, vector<1x32xf32>
    %64 = vector.broadcast %63 : vector<1x32xf32> to vector<16x32xf32>
    %65 = arith.mulf %62, %64 : vector<16x32xf32>
    %c171 = arith.constant 171 : index
    %c0_25 = arith.constant 0 : index
    %66 = vector.load %arg2[%c171, %c0_25] : memref<172x32xf32, #tpu.memory_space<vmem>>, vector<1x32xf32>
    %67 = vector.broadcast %66 : vector<1x32xf32> to vector<16x32xf32>
    %68 = arith.addf %65, %67 : vector<16x32xf32>
    %c0_26 = arith.constant 0 : index
    %c0_27 = arith.constant 0 : index
    %69 = vector.load %arg3[%c0_26, %c0_27] : memref<16x32xf32, #tpu.memory_space<vmem>>, vector<16x32xf32>
    tpu.vector_store %arg3[%c0_26, %c0_27], %68 {strides = array<i32>} : memref<16x32xf32, #tpu.memory_space<vmem>>, vector<16x32xf32>,
    return
  }
  func.func @transform_0(%arg0: i32) -> (i32, i32, i32) {
    %c0_i32 = arith.constant 0 : i32
    %c0_i32_0 = arith.constant 0 : i32
    %c0_i32_1 = arith.constant 0 : i32
    return %c0_i32, %arg0, %c0_i32_0 : i32, i32, i32
  }
  func.func @transform_1(%arg0: i32) -> (i32, i32) {
    %c0_i32 = arith.constant 0 : i32
    %c0_i32_0 = arith.constant 0 : i32
    %c0_i32_1 = arith.constant 0 : i32
    return %c0_i32, %c0_i32_0 : i32, i32
  }
  func.func @transform_2(%arg0: i32) -> (i32, i32) {
    %c0_i32 = arith.constant 0 : i32
    %c0_i32_0 = arith.constant 0 : i32
    return %arg0, %c0_i32 : i32, i32
  }
}

module attributes {stable_mosaic.version = 11 : i64} {
  func.func @_mha_pos_kernel(%arg0: i32, %arg1: memref<4x16x32xf32, #tpu.memory_space<vmem>>, %arg2: memref<172x32xf32, #tpu.memory_space<vmem>>, %arg3: memref<16x32xf32, #tpu.memory_space<vmem>>) attributes {dimension_semantics = [#tpu.dimension_semantics<parallel>], iteration_bounds = array<i64: 1>, scalar_prefetch = 0 : i64, scratch_operands = 0 : i64, tpu.core_type = #tpu.core_type<tc>, window_params = [{transform_indices = @transform_0, window_bounds = array<i64: 4, 16, 32>}, {pipeline_mode = #tpu.pipeline_mode<synchronous>, transform_indices = @transform_1, window_bounds = array<i64: 172, 32>}, {transform_indices = @transform_2, window_bounds = array<i64: 16, 32>}]} {
    %c0 = arith.constant 0 : index
    %c0_0 = arith.constant 0 : index
    %c0_1 = arith.constant 0 : index
    %0 = vector.load %arg1[%c0, %c0_0, %c0_1] : memref<4x16x32xf32, #tpu.memory_space<vmem>>, vector<4x16x32xf32>
    %1 = vector.shape_cast %0 : vector<4x16x32xf32> to vector<64x32xf32>
    %c32 = arith.constant 32 : index
    %c0_2 = arith.constant 0 : index
    %2 = vector.load %arg2[%c32, %c0_2] : memref<172x32xf32, #tpu.memory_space<vmem>>, vector<32x32xf32>
    %cst = arith.constant dense<0.000000e+00> : vector<64x32xf32>
    %3 = tpu.matmul %1, %2, %cst {dimension_numbers = #tpu.dot_dimension_numbers<[1], [0], [0], [1], [0, 0, 1, 1], [], []>} : vector<64x32xf32>, vector<32x32xf32>, vector<64x32xf32> -> vector<64x32xf32>
    %4 = vector.shape_cast %3 : vector<64x32xf32> to vector<4x16x32xf32>
    %c161 = arith.constant 161 : index
    %c0_3 = arith.constant 0 : index
    %5 = vector.load %arg2[%c161, %c0_3] : memref<172x32xf32, #tpu.memory_space<vmem>>, vector<4x32xf32>
    %6 = vector.shape_cast %5 : vector<4x32xf32> to vector<4x1x32xf32>
    %7 = vector.broadcast %6 : vector<4x1x32xf32> to vector<4x16x32xf32>
    %8 = arith.addf %4, %7 : vector<4x16x32xf32>
    %c64 = arith.constant 64 : index
    %c0_4 = arith.constant 0 : index
    %9 = vector.load %arg2[%c64, %c0_4] : memref<172x32xf32, #tpu.memory_space<vmem>>, vector<32x32xf32>
    %cst_5 = arith.constant dense<0.000000e+00> : vector<64x32xf32>
    %10 = tpu.matmul %1, %9, %cst_5 {dimension_numbers = #tpu.dot_dimension_numbers<[1], [0], [0], [1], [0, 0, 1, 1], [], []>} : vector<64x32xf32>, vector<32x32xf32>, vector<64x32xf32> -> vector<64x32xf32>
    %11 = vector.shape_cast %10 : vector<64x32xf32> to vector<4x16x32xf32>
    %c165 = arith.constant 165 : index
    %c0_6 = arith.constant 0 : index
    %12 = vector.load %arg2[%c165, %c0_6] : memref<172x32xf32, #tpu.memory_space<vmem>>, vector<4x32xf32>
    %13 = vector.shape_cast %12 : vector<4x32xf32> to vector<4x1x32xf32>
    %14 = vector.broadcast %13 : vector<4x1x32xf32> to vector<4x16x32xf32>
    %15 = arith.addf %11, %14 : vector<4x16x32xf32>
    %16 = vector.extract_strided_slice %1 {offsets = [0, 0], sizes = [16, 32], strides = [1, 1]} : vector<64x32xf32> to vector<16x32xf32>
    %c0_7 = arith.constant 0 : index
    %c0_8 = arith.constant 0 : index
    %17 = vector.load %arg2[%c0_7, %c0_8] : memref<172x32xf32, #tpu.memory_space<vmem>>, vector<32x32xf32>
    %cst_9 = arith.constant dense<0.000000e+00> : vector<16x32xf32>
    %18 = tpu.matmul %16, %17, %cst_9 {dimension_numbers = #tpu.dot_dimension_numbers<[1], [0], [0], [1], [0, 0, 1, 1], [], []>} : vector<16x32xf32>, vector<32x32xf32>, vector<16x32xf32> -> vector<16x32xf32>
    %c160 = arith.constant 160 : index
    %c0_10 = arith.constant 0 : index
    %19 = vector.load %arg2[%c160, %c0_10] : memref<172x32xf32, #tpu.memory_space<vmem>>, vector<1x32xf32>
    %20 = vector.broadcast %19 : vector<1x32xf32> to vector<16x32xf32>
    %21 = arith.addf %18, %20 : vector<16x32xf32>
    %22 = vector.shape_cast %21 : vector<16x32xf32> to vector<1x16x32xf32>
    %23 = vector.broadcast %22 : vector<1x16x32xf32> to vector<4x16x32xf32>
    %24 = arith.mulf %8, %23 : vector<4x16x32xf32>
    %25 = vector.shape_cast %24 : vector<4x16x32xf32> to vector<64x32xf32>
    %c96 = arith.constant 96 : index
    %c0_11 = arith.constant 0 : index
    %26 = vector.load %arg2[%c96, %c0_11] : memref<172x32xf32, #tpu.memory_space<vmem>>, vector<32x32xf32>
    %cst_12 = arith.constant dense<0.000000e+00> : vector<64x32xf32>
    %27 = tpu.matmul %25, %26, %cst_12 {dimension_numbers = #tpu.dot_dimension_numbers<[1], [0], [0], [1], [0, 0, 1, 1], [], []>} : vector<64x32xf32>, vector<32x32xf32>, vector<64x32xf32> -> vector<64x32xf32>
    %28 = vector.shape_cast %27 : vector<64x32xf32> to vector<4x16x32xf32>
    %cst_13 = arith.constant dense<0xFF800000> : vector<16x32xf32>
    %29 = vector.multi_reduction <maximumf>, %28, %cst_13 [0] : vector<4x16x32xf32> to vector<16x32xf32>
    %30 = vector.shape_cast %29 : vector<16x32xf32> to vector<1x16x32xf32>
    %31 = vector.broadcast %30 : vector<1x16x32xf32> to vector<4x16x32xf32>
    %32 = arith.subf %28, %31 : vector<4x16x32xf32>
    %33 = math.exp %32 : vector<4x16x32xf32>
    %cst_14 = arith.constant dense<0.000000e+00> : vector<16x32xf32>
    %34 = vector.multi_reduction <add>, %33, %cst_14 [0] : vector<4x16x32xf32> to vector<16x32xf32>
    %35 = vector.shape_cast %34 : vector<16x32xf32> to vector<1x16x32xf32>
    %36 = vector.broadcast %35 : vector<1x16x32xf32> to vector<4x16x32xf32>
    %37 = arith.divf %33, %36 : vector<4x16x32xf32>
    %38 = arith.mulf %37, %15 : vector<4x16x32xf32>
    %cst_15 = arith.constant dense<0.000000e+00> : vector<16x32xf32>
    %39 = vector.multi_reduction <add>, %38, %cst_15 [0] : vector<4x16x32xf32> to vector<16x32xf32>
    %c128 = arith.constant 128 : index
    %c0_16 = arith.constant 0 : index
    %40 = vector.load %arg2[%c128, %c0_16] : memref<172x32xf32, #tpu.memory_space<vmem>>, vector<32x32xf32>
    %cst_17 = arith.constant dense<0.000000e+00> : vector<16x32xf32>
    %41 = tpu.matmul %39, %40, %cst_17 {dimension_numbers = #tpu.dot_dimension_numbers<[1], [0], [0], [1], [0, 0, 1, 1], [], []>} : vector<16x32xf32>, vector<32x32xf32>, vector<16x32xf32> -> vector<16x32xf32>
    %c169 = arith.constant 169 : index
    %c0_18 = arith.constant 0 : index
    %42 = vector.load %arg2[%c169, %c0_18] : memref<172x32xf32, #tpu.memory_space<vmem>>, vector<1x32xf32>
    %43 = vector.broadcast %42 : vector<1x32xf32> to vector<16x32xf32>
    %44 = arith.addf %41, %43 : vector<16x32xf32>
    %cst_19 = arith.constant dense<0.000000e+00> : vector<16xf32>
    %45 = vector.multi_reduction <add>, %44, %cst_19 [1] : vector<16x32xf32> to vector<16xf32>
    %46 = vector.shape_cast %45 : vector<16xf32> to vector<16x1xf32>
    %cst_20 = arith.constant 3.200000e+01 : f32
    %47 = vector.broadcast %cst_20 : f32 to vector<16x1xf32>
    %48 = arith.divf %46, %47 : vector<16x1xf32>
    %49 = vector.broadcast %48 : vector<16x1xf32> to vector<16x32xf32>
    %50 = arith.subf %44, %49 : vector<16x32xf32>
    %51 = arith.mulf %50, %50 : vector<16x32xf32>
    %cst_21 = arith.constant dense<0.000000e+00> : vector<16xf32>
    %52 = vector.multi_reduction <add>, %51, %cst_21 [1] : vector<16x32xf32> to vector<16xf32>
    %53 = vector.shape_cast %52 : vector<16xf32> to vector<16x1xf32>
    %cst_22 = arith.constant 3.200000e+01 : f32
    %54 = vector.broadcast %cst_22 : f32 to vector<16x1xf32>
    %55 = arith.divf %53, %54 : vector<16x1xf32>
    %56 = vector.broadcast %48 : vector<16x1xf32> to vector<16x32xf32>
    %57 = arith.subf %44, %56 : vector<16x32xf32>
    %cst_23 = arith.constant 9.99999974E-6 : f32
    %58 = vector.broadcast %cst_23 : f32 to vector<16x1xf32>
    %59 = arith.addf %55, %58 : vector<16x1xf32>
    %60 = math.rsqrt %59 : vector<16x1xf32>
    %61 = vector.broadcast %60 : vector<16x1xf32> to vector<16x32xf32>
    %62 = arith.mulf %57, %61 : vector<16x32xf32>
    %c170 = arith.constant 170 : index
    %c0_24 = arith.constant 0 : index
    %63 = vector.load %arg2[%c170, %c0_24] : memref<172x32xf32, #tpu.memory_space<vmem>>, vector<1x32xf32>
    %64 = vector.broadcast %63 : vector<1x32xf32> to vector<16x32xf32>
    %65 = arith.mulf %62, %64 : vector<16x32xf32>
    %c171 = arith.constant 171 : index
    %c0_25 = arith.constant 0 : index
    %66 = vector.load %arg2[%c171, %c0_25] : memref<172x32xf32, #tpu.memory_space<vmem>>, vector<1x32xf32>
    %67 = vector.broadcast %66 : vector<1x32xf32> to vector<16x32xf32>
    %68 = arith.addf %65, %67 : vector<16x32xf32>
    %c0_26 = arith.constant 0 : index
    %c0_27 = arith.constant 0 : index
    %69 = vector.load %arg3[%c0_26, %c0_27] : memref<16x32xf32, #tpu.memory_space<vmem>>, vector<16x32xf32>
    tpu.vector_store %arg3[%c0_26, %c0_27], %68 {strides = array<i32>} : memref<16x32xf32, #tpu.memory_space<vmem>>, vector<16x32xf32>,
    return
  }
  func.func @transform_0(%arg0: i32) -> (i32, i32, i32) {
    %c0_i32 = arith.constant 0 : i32
    %c0_i32_0 = arith.constant 0 : i32
    %c0_i32_1 = arith.constant 0 : i32
    return %c0_i32, %arg0, %c0_i32_0 : i32, i32, i32
  }
  func.func @transform_1(%arg0: i32) -> (i32, i32) {
    %c0_i32 = arith.constant 0 : i32
    %c0_i32_0 = arith.constant 0 : i32
    %c0_i32_1 = arith.constant 0 : i32
    return %c0_i32, %c0_i32_0 : i32, i32
  }
  func.func @transform_2(%arg0: i32) -> (i32, i32) {
    %c0_i32 = arith.constant 0 : i32
    %c0_i32_0 = arith.constant 0 : i32
    return %arg0, %c0_i32 : i32, i32
  }
}

</mosaic_0001>

<llo_original>
// kernel: tpu_custom_call.1
$region0: #{tpu_custom_call.1}
  #allocation0 [shape = 'u32[]', space=smem, size = 0x4, offset = 0x4, fixed_abs, tag = 'smem constant byte address 0x4 - core index']
  #allocation1 [shape = 'u32[144,128]{1,0:T(1,128)}', space=vmem, size = 0x12000, scoped, tag = 'internal scratch']
  %s0 = inlined_call_operand.vmem [shape: f32[4,16,32], index: 0, kind: input, shape index: {}]
  %s1 = inlined_call_operand.vmem [shape: f32[172,32], index: 1, kind: input, shape index: {}]
  %s2 = inlined_call_operand.hbm [shape: f32[16,32], index: 2, kind: output, shape index: {}]
  %s3 = sld [smem:[#allocation0]]
  $region18: #{tpu_custom_call.1} parent=0
    _
  %s5 = ssub.s32 1, %s3
  %s6 = scalar_select 0, %s5, %s3
  $region1: #{tpu_custom_call.1} parent=0
    #allocation2 [shape = 'u8[8192]{0}', space=vmem, size = 0x2000, scoped, tag = 'output window, operand 0, single buffered']
    #allocation3 [shape = 's32[1]{0}', space=sflag, size = 0x4, scoped, tag = 'scoped memory for tpu_custom_call.1']
    %7 = vsyncpa [#allocation3], 0
    // Predicated region
    $region2: #{tpu_custom_call.1} parent=1 // pred_check
      _
    $region3: #{tpu_custom_call.1} parent=1 // pred_check_branch
      %9 = sbr.rel (0) target = $region5
    $region4: #{tpu_custom_call.1} parent=1 // pred_region
      _
    $region5: #{tpu_custom_call.1} parent=1 // pred_fallthru
      _
    // Predicated region
    $region6: #{tpu_custom_call.1} parent=1 // pred_check
      _
    $region7: #{tpu_custom_call.1} parent=1 // pred_check_branch
      %11 = sbr.rel (0) target = $region9
    $region8: #{tpu_custom_call.1} parent=1 // pred_region
      _
    $region9: #{tpu_custom_call.1} parent=1 // pred_fallthru
      _
    %v12 = vld [vmem:[%s0] sm:$0xff]
    %v13 = vld [vmem:[%s0 + $0x8] sm:$0xff]
    %v14 = vld [vmem:[%s0 + $0x10] sm:$0xff]
    %v15 = vld [vmem:[%s0 + $0x18] sm:$0xff]
    %v16 = vld [vmem:[%s0 + $0x20] sm:$0xff]
    %v17 = vld [vmem:[%s0 + $0x28] sm:$0xff]
    %v18 = vld [vmem:[%s0 + $0x30] sm:$0xff]
    %v19 = vld [vmem:[%s0 + $0x38] sm:$0xff]
    %v20 = vld [vmem:[%s1 + $0x20] sm:$0xff]
    %v21 = vld [vmem:[%s1 + $0x28] sm:$0xff]
    %v22 = vld [vmem:[%s1 + $0x30] sm:$0xff]
    %v23 = vld [vmem:[%s1 + $0x38] sm:$0xff]
    %vm24 = vcmask 261120
    %v26 = vsel %vm24, %v12, 0
    %v29 = vsel %vm24, %v13, 0
    %v32 = vsel %vm24, %v14, 0
    %v35 = vsel %vm24, %v15, 0
    %v38 = vsel %vm24, %v16, 0
    %v41 = vsel %vm24, %v17, 0
    %v44 = vsel %vm24, %v18, 0
    %v47 = vsel %vm24, %v19, 0
    %49 = vmatprep.subr.mxu0 0.0
    %50 = vmatpush1.msra.mxu0 %v20
    %51 = vmatprep.subr.mxu0 0.0
    %52 = vmatpush1.msra.mxu0 %v21
    %53 = vmatprep.subr.mxu0 0.0
    %54 = vmatpush1.msra.mxu0 %v22
    %55 = vmatprep.subr.mxu0 0.0
    %56 = vmatpush1.msra.mxu0 %v23
    %57 = vmatprep.subr.mxu0 0.0
    %58 = vmatpush1.msra.mxu0 0.0
    %59 = vmatprep.subr.mxu0 0.0
    %60 = vmatpush1.msra.mxu0 0.0
    %61 = vmatprep.subr.mxu0 0.0
    %62 = vmatpush1.msra.mxu0 0.0
    %63 = vmatprep.subr.mxu0 0.0
    %64 = vmatpush1.msra.mxu0 0.0
    %65 = vmatprep.subr.mxu0 0.0
    %66 = vmatpush1.msra.mxu0 0.0
    %67 = vmatprep.subr.mxu0 0.0
    %68 = vmatpush1.msra.mxu0 0.0
    %69 = vmatprep.subr.mxu0 0.0
    %70 = vmatpush1.msra.mxu0 0.0
    %71 = vmatprep.subr.mxu0 0.0
    %72 = vmatpush1.msra.mxu0 0.0
    %73 = vmatprep.subr.mxu0 0.0
    %74 = vmatpush1.msra.mxu0 0.0
    %75 = vmatprep.subr.mxu0 0.0
    %76 = vmatpush1.msra.mxu0 0.0
    %77 = vmatprep.subr.mxu0 0.0
    %78 = vmatpush1.msra.mxu0 0.0
    %79 = vmatprep.subr.mxu0 0.0
    %80 = vmatpush1.msra.mxu0 0.0
    %81 = vmatprep.subr.mxu0 0.0
    %82 = vmatpush1.msra.mxu0 0.0
    %83 = vmatprep.subr.mxu0 0.0
    %84 = vmatpush1.msra.mxu0 0.0
    %85 = vmatprep.subr.mxu0 0.0
    %86 = vmatpush1.msra.mxu0 0.0
    %87 = vmatprep.subr.mxu0 0.0
    %88 = vmatpush1.msra.mxu0 0.0
    %89 = vmatprep.subr.mxu0 0.0
    %90 = vmatpush1.msra.mxu0 0.0
    %91 = vmatprep.subr.mxu0 0.0
    %92 = vmatpush1.msra.mxu0 0.0
    %93 = vmatprep.subr.mxu0 0.0
    %94 = vmatpush1.msra.mxu0 0.0
    %95 = vmatprep.subr.mxu0 0.0
    %96 = vmatpush1.msra.mxu0 0.0
    %97 = vmatprep.subr.mxu0 0.0
    %98 = vmatpush1.msra.mxu0 0.0
    %99 = vmatprep.subr.mxu0 0.0
    %100 = vmatpush1.msra.mxu0 0.0
    %101 = vmatprep.subr.mxu0 0.0
    %102 = vmatpush1.msra.mxu0 0.0
    %103 = vmatprep.subr.mxu0 0.0
    %104 = vmatpush1.msra.mxu0 0.0
    %105 = vmatprep.subr.mxu0 0.0
    %106 = vmatpush1.msra.mxu0 0.0
    %107 = vmatprep.subr.mxu0 0.0
    %108 = vmatpush1.msra.mxu0 0.0
    %109 = vmatprep.subr.mxu0 0.0
    %110 = vmatpush1.msra.mxu0 0.0
    %111 = vmatprep.subr.mxu0 0.0
    %112 = vmatpush1.msra.mxu0 0.0
    %113 = vmatprep.mubr.f32.mxu0 0.0
    %114 = vmatmul.mubr.f32.gmra.mrb[0].mxu0 %v26
    %v115 = vpop.f32.mrb[0].mxu0
    %v116 = vadd.f32 0.0, %v115
    %v117 = vpop.f32.mrb[0].mxu0
    %118 = vmatprep.mubr.f32.mxu0 0.0
    %119 = vmatmul.mubr.f32.gmra.mrb[0].mxu0 %v29
    %v120 = vpop.f32.mrb[0].mxu0
    %v121 = vadd.f32 0.0, %v120
    %v122 = vpop.f32.mrb[0].mxu0
    %123 = vmatprep.mubr.f32.mxu0 0.0
    %124 = vmatmul.mubr.f32.gmra.mrb[0].mxu0 %v32
    %v125 = vpop.f32.mrb[0].mxu0
    %v126 = vadd.f32 0.0, %v125
    %v127 = vpop.f32.mrb[0].mxu0
    %128 = vmatprep.mubr.f32.mxu0 0.0
    %129 = vmatmul.mubr.f32.gmra.mrb[0].mxu0 %v35
    %v130 = vpop.f32.mrb[0].mxu0
    %v131 = vadd.f32 0.0, %v130
    %v132 = vpop.f32.mrb[0].mxu0
    %133 = vmatprep.mubr.f32.mxu0 0.0
    %134 = vmatmul.mubr.f32.gmra.mrb[0].mxu0 %v38
    %v135 = vpop.f32.mrb[0].mxu0
    %v136 = vadd.f32 0.0, %v135
    %v137 = vpop.f32.mrb[0].mxu0
    %138 = vmatprep.mubr.f32.mxu0 0.0
    %139 = vmatmul.mubr.f32.gmra.mrb[0].mxu0 %v41
    %v140 = vpop.f32.mrb[0].mxu0
    %v141 = vadd.f32 0.0, %v140
    %v142 = vpop.f32.mrb[0].mxu0
    %143 = vmatprep.mubr.f32.mxu0 0.0
    %144 = vmatmul.mubr.f32.gmra.mrb[0].mxu0 %v44
    %v145 = vpop.f32.mrb[0].mxu0
    %v146 = vadd.f32 0.0, %v145
    %v147 = vpop.f32.mrb[0].mxu0
    %148 = vmatprep.mubr.f32.mxu0 0.0
    %149 = vmatmul.mubr.f32.gmra.mrb[0].mxu0 %v47
    %v150 = vpop.f32.mrb[0].mxu0
    %v151 = vadd.f32 0.0, %v150
    %v152 = vpop.f32.mrb[0].mxu0
    %153 = vdwg.mxu0
    %v154 = vld [vmem:[%s1 + $0xa1] sm:$0xf]
    %v157 = vunpack.c.l.s4 1966171168
    %v158 = vunpack.c.0.s8 %v157
    %v159 = vlaneseq
    %v160 = vshrl.u32 %v159, 7
    %v161 = vsub.s32 %v158, %v160
    %v162 = vrot.slane %v154, %v161
    %v163 = vcombine.high %v162, %v162
    %v165 = vunpack.c.l.s4 1966171168
    %v166 = vunpack.c.0.s8 %v165
    %v167 = vlaneseq
    %v168 = vshrl.u32 %v167, 7
    %v169 = vsub.s32 %v166, %v168
    %v170 = vrot.slane %v162, %v169
    %v172 = vunpack.c.l.s4 1966171168
    %v173 = vunpack.c.0.s8 %v172
    %v174 = vlaneseq
    %v175 = vshrl.u32 %v174, 7
    %v176 = vsub.s32 %v173, %v175
    %v177 = vrot.slane %v163, %v176
    %v178 = vcombine.high %v170, %v170
    %v179 = vcombine.high %v177, %v177
    %v180 = vlaneseq
    %v181 = vshrl.u32 %v180, 7
    %v182 = vsub.s32 0, %v181
    %v183 = vrot.slane %v170, %v182
    %v184 = vlaneseq
    %v185 = vshrl.u32 %v184, 7
    %v186 = vsub.s32 0, %v185
    %v187 = vrot.slane %v177, %v186
    %v188 = vlaneseq
    %v189 = vshrl.u32 %v188, 7
    %v190 = vsub.s32 0, %v189
    %v191 = vrot.slane %v178, %v190
    %v192 = vlaneseq
    %v193 = vshrl.u32 %v192, 7
    %v194 = vsub.s32 0, %v193
    %v195 = vrot.slane %v179, %v194
    %v200 = vadd.f32 %v116, %v183
    %v201 = vadd.f32 %v121, %v183
    %v202 = vadd.f32 %v126, %v187
    %v203 = vadd.f32 %v131, %v187
    %v204 = vadd.f32 %v136, %v191
    %v205 = vadd.f32 %v141, %v191
    %v206 = vadd.f32 %v146, %v195
    %v207 = vadd.f32 %v151, %v195
    %v208 = vld [vmem:[%s1 + $0x40] sm:$0xff]
    %v209 = vld [vmem:[%s1 + $0x48] sm:$0xff]
    %v210 = vld [vmem:[%s1 + $0x50] sm:$0xff]
    %v211 = vld [vmem:[%s1 + $0x58] sm:$0xff]
    %212 = vmatprep.subr.mxu0 0.0
    %213 = vmatpush1.msra.mxu0 %v208
    %214 = vmatprep.subr.mxu0 0.0
    %215 = vmatpush1.msra.mxu0 %v209
    %216 = vmatprep.subr.mxu0 0.0
    %217 = vmatpush1.msra.mxu0 %v210
    %218 = vmatprep.subr.mxu0 0.0
    %219 = vmatpush1.msra.mxu0 %v211
    %220 = vmatprep.subr.mxu0 0.0
    %221 = vmatpush1.msra.mxu0 0.0
    %222 = vmatprep.subr.mxu0 0.0
    %223 = vmatpush1.msra.mxu0 0.0
    %224 = vmatprep.subr.mxu0 0.0
    %225 = vmatpush1.msra.mxu0 0.0
    %226 = vmatprep.subr.mxu0 0.0
    %227 = vmatpush1.msra.mxu0 0.0
    %228 = vmatprep.subr.mxu0 0.0
    %229 = vmatpush1.msra.mxu0 0.0
    %230 = vmatprep.subr.mxu0 0.0
    %231 = vmatpush1.msra.mxu0 0.0
    %232 = vmatprep.subr.mxu0 0.0
    %233 = vmatpush1.msra.mxu0 0.0
    %234 = vmatprep.subr.mxu0 0.0
    %235 = vmatpush1.msra.mxu0 0.0
    %236 = vmatprep.subr.mxu0 0.0
    %237 = vmatpush1.msra.mxu0 0.0
    %238 = vmatprep.subr.mxu0 0.0
    %239 = vmatpush1.msra.mxu0 0.0
    %240 = vmatprep.subr.mxu0 0.0
    %241 = vmatpush1.msra.mxu0 0.0
    %242 = vmatprep.subr.mxu0 0.0
    %243 = vmatpush1.msra.mxu0 0.0
    %244 = vmatprep.subr.mxu0 0.0
    %245 = vmatpush1.msra.mxu0 0.0
    %246 = vmatprep.subr.mxu0 0.0
    %247 = vmatpush1.msra.mxu0 0.0
    %248 = vmatprep.subr.mxu0 0.0
    %249 = vmatpush1.msra.mxu0 0.0
    %250 = vmatprep.subr.mxu0 0.0
    %251 = vmatpush1.msra.mxu0 0.0
    %252 = vmatprep.subr.mxu0 0.0
    %253 = vmatpush1.msra.mxu0 0.0
    %254 = vmatprep.subr.mxu0 0.0
    %255 = vmatpush1.msra.mxu0 0.0
    %256 = vmatprep.subr.mxu0 0.0
    %257 = vmatpush1.msra.mxu0 0.0
    %258 = vmatprep.subr.mxu0 0.0
    %259 = vmatpush1.msra.mxu0 0.0
    %260 = vmatprep.subr.mxu0 0.0
    %261 = vmatpush1.msra.mxu0 0.0
    %262 = vmatprep.subr.mxu0 0.0
    %263 = vmatpush1.msra.mxu0 0.0
    %264 = vmatprep.subr.mxu0 0.0
    %265 = vmatpush1.msra.mxu0 0.0
    %266 = vmatprep.subr.mxu0 0.0
    %267 = vmatpush1.msra.mxu0 0.0
    %268 = vmatprep.subr.mxu0 0.0
    %269 = vmatpush1.msra.mxu0 0.0
    %270 = vmatprep.subr.mxu0 0.0
    %271 = vmatpush1.msra.mxu0 0.0
    %272 = vmatprep.subr.mxu0 0.0
    %273 = vmatpush1.msra.mxu0 0.0
    %274 = vmatprep.subr.mxu0 0.0
    %275 = vmatpush1.msra.mxu0 0.0
    %276 = vmatprep.mubr.f32.mxu0 0.0
    %277 = vmatmul.mubr.f32.gmra.mrb[0].mxu0 %v26
    %v278 = vpop.f32.mrb[0].mxu0
    %v279 = vadd.f32 0.0, %v278
    %v280 = vpop.f32.mrb[0].mxu0
    %281 = vmatprep.mubr.f32.mxu0 0.0
    %282 = vmatmul.mubr.f32.gmra.mrb[0].mxu0 %v29
    %v283 = vpop.f32.mrb[0].mxu0
    %v284 = vadd.f32 0.0, %v283
    %v285 = vpop.f32.mrb[0].mxu0
    %286 = vmatprep.mubr.f32.mxu0 0.0
    %287 = vmatmul.mubr.f32.gmra.mrb[0].mxu0 %v32
    %v288 = vpop.f32.mrb[0].mxu0
    %v289 = vadd.f32 0.0, %v288
    %v290 = vpop.f32.mrb[0].mxu0
    %291 = vmatprep.mubr.f32.mxu0 0.0
    %292 = vmatmul.mubr.f32.gmra.mrb[0].mxu0 %v35
    %v293 = vpop.f32.mrb[0].mxu0
    %v294 = vadd.f32 0.0, %v293
    %v295 = vpop.f32.mrb[0].mxu0
    %296 = vmatprep.mubr.f32.mxu0 0.0
    %297 = vmatmul.mubr.f32.gmra.mrb[0].mxu0 %v38
    %v298 = vpop.f32.mrb[0].mxu0
    %v299 = vadd.f32 0.0, %v298
    %v300 = vpop.f32.mrb[0].mxu0
    %301 = vmatprep.mubr.f32.mxu0 0.0
    %302 = vmatmul.mubr.f32.gmra.mrb[0].mxu0 %v41
    %v303 = vpop.f32.mrb[0].mxu0
    %v304 = vadd.f32 0.0, %v303
    %v305 = vpop.f32.mrb[0].mxu0
    %306 = vmatprep.mubr.f32.mxu0 0.0
    %307 = vmatmul.mubr.f32.gmra.mrb[0].mxu0 %v44
    %v308 = vpop.f32.mrb[0].mxu0
    %v309 = vadd.f32 0.0, %v308
    %v310 = vpop.f32.mrb[0].mxu0
    %311 = vmatprep.mubr.f32.mxu0 0.0
    %312 = vmatmul.mubr.f32.gmra.mrb[0].mxu0 %v47
    %v313 = vpop.f32.mrb[0].mxu0
    %v314 = vadd.f32 0.0, %v313
    %v315 = vpop.f32.mrb[0].mxu0
    %316 = vdwg.mxu0
    %v317 = vld [vmem:[%s1 + $0xa5] sm:$0xf]
    %v320 = vunpack.c.l.s4 1966171168
    %v321 = vunpack.c.0.s8 %v320
    %v322 = vlaneseq
    %v323 = vshrl.u32 %v322, 7
    %v324 = vsub.s32 %v321, %v323
    %v325 = vrot.slane %v317, %v324
    %v326 = vcombine.high %v325, %v325
    %v328 = vunpack.c.l.s4 1966171168
    %v329 = vunpack.c.0.s8 %v328
    %v330 = vlaneseq
    %v331 = vshrl.u32 %v330, 7
    %v332 = vsub.s32 %v329, %v331
    %v333 = vrot.slane %v325, %v332
    %v335 = vunpack.c.l.s4 1966171168
    %v336 = vunpack.c.0.s8 %v335
    %v337 = vlaneseq
    %v338 = vshrl.u32 %v337, 7
    %v339 = vsub.s32 %v336, %v338
    %v340 = vrot.slane %v326, %v339
    %v341 = vcombine.high %v333, %v333
    %v342 = vcombine.high %v340, %v340
    %v343 = vlaneseq
    %v344 = vshrl.u32 %v343, 7
    %v345 = vsub.s32 0, %v344
    %v346 = vrot.slane %v333, %v345
    %v347 = vlaneseq
    %v348 = vshrl.u32 %v347, 7
    %v349 = vsub.s32 0, %v348
    %v350 = vrot.slane %v340, %v349
    %v351 = vlaneseq
    %v352 = vshrl.u32 %v351, 7
    %v353 = vsub.s32 0, %v352
    %v354 = vrot.slane %v341, %v353
    %v355 = vlaneseq
    %v356 = vshrl.u32 %v355, 7
    %v357 = vsub.s32 0, %v356
    %v358 = vrot.slane %v342, %v357
    %v363 = vadd.f32 %v279, %v346
    %v364 = vadd.f32 %v284, %v346
    %v365 = vadd.f32 %v289, %v350
    %v366 = vadd.f32 %v294, %v350
    %v367 = vadd.f32 %v299, %v354
    %v368 = vadd.f32 %v304, %v354
    %v369 = vadd.f32 %v309, %v358
    %v370 = vadd.f32 %v314, %v358
    %v371 = vld [vmem:[%s1] sm:$0xff]
    %v372 = vld [vmem:[%s1 + $0x8] sm:$0xff]
    %v373 = vld [vmem:[%s1 + $0x10] sm:$0xff]
    %v374 = vld [vmem:[%s1 + $0x18] sm:$0xff]
    %v375 = vld [vmem:[%s1 + $0xa0] sm:$0x1]
    %v376 = vlaneseq
    %v377 = vshrl.u32 %v376, 7
    %v378 = vsub.s32 0, %v377
    %v379 = vrot.slane %v375, %v378
    %380 = vmatprep.subr.mxu0 0.0
    %381 = vmatpush1.msra.mxu0 %v371
    %382 = vmatprep.subr.mxu0 0.0
    %383 = vmatpush1.msra.mxu0 %v372
    %384 = vmatprep.subr.mxu0 0.0
    %385 = vmatpush1.msra.mxu0 %v373
    %386 = vmatprep.subr.mxu0 0.0
    %387 = vmatpush1.msra.mxu0 %v374
    %388 = vmatprep.subr.mxu0 0.0
    %389 = vmatpush1.msra.mxu0 0.0
    %390 = vmatprep.subr.mxu0 0.0
    %391 = vmatpush1.msra.mxu0 0.0
    %392 = vmatprep.subr.mxu0 0.0
    %393 = vmatpush1.msra.mxu0 0.0
    %394 = vmatprep.subr.mxu0 0.0
    %395 = vmatpush1.msra.mxu0 0.0
    %396 = vmatprep.subr.mxu0 0.0
    %397 = vmatpush1.msra.mxu0 0.0
    %398 = vmatprep.subr.mxu0 0.0
    %399 = vmatpush1.msra.mxu0 0.0
    %400 = vmatprep.subr.mxu0 0.0
    %401 = vmatpush1.msra.mxu0 0.0
    %402 = vmatprep.subr.mxu0 0.0
    %403 = vmatpush1.msra.mxu0 0.0
    %404 = vmatprep.subr.mxu0 0.0
    %405 = vmatpush1.msra.mxu0 0.0
    %406 = vmatprep.subr.mxu0 0.0
    %407 = vmatpush1.msra.mxu0 0.0
    %408 = vmatprep.subr.mxu0 0.0
    %409 = vmatpush1.msra.mxu0 0.0
    %410 = vmatprep.subr.mxu0 0.0
    %411 = vmatpush1.msra.mxu0 0.0
    %412 = vmatprep.subr.mxu0 0.0
    %413 = vmatpush1.msra.mxu0 0.0
    %414 = vmatprep.subr.mxu0 0.0
    %415 = vmatpush1.msra.mxu0 0.0
    %416 = vmatprep.subr.mxu0 0.0
    %417 = vmatpush1.msra.mxu0 0.0
    %418 = vmatprep.subr.mxu0 0.0
    %419 = vmatpush1.msra.mxu0 0.0
    %420 = vmatprep.subr.mxu0 0.0
    %421 = vmatpush1.msra.mxu0 0.0
    %422 = vmatprep.subr.mxu0 0.0
    %423 = vmatpush1.msra.mxu0 0.0
    %424 = vmatprep.subr.mxu0 0.0
    %425 = vmatpush1.msra.mxu0 0.0
    %426 = vmatprep.subr.mxu0 0.0
    %427 = vmatpush1.msra.mxu0 0.0
    %428 = vmatprep.subr.mxu0 0.0
    %429 = vmatpush1.msra.mxu0 0.0
    %430 = vmatprep.subr.mxu0 0.0
    %431 = vmatpush1.msra.mxu0 0.0
    %432 = vmatprep.subr.mxu0 0.0
    %433 = vmatpush1.msra.mxu0 0.0
    %434 = vmatprep.subr.mxu0 0.0
    %435 = vmatpush1.msra.mxu0 0.0
    %436 = vmatprep.subr.mxu0 0.0
    %437 = vmatpush1.msra.mxu0 0.0
    %438 = vmatprep.subr.mxu0 0.0
    %439 = vmatpush1.msra.mxu0 0.0
    %440 = vmatprep.subr.mxu0 0.0
    %441 = vmatpush1.msra.mxu0 0.0
    %442 = vmatprep.subr.mxu0 0.0
    %443 = vmatpush1.msra.mxu0 0.0
    %444 = vmatprep.mubr.f32.mxu0 0.0
    %445 = vmatmul.mubr.f32.gmra.mrb[0].mxu0 %v26
    %v446 = vpop.f32.mrb[0].mxu0
    %v447 = vadd.f32 %v379, %v446
    %v448 = vpop.f32.mrb[0].mxu0
    %449 = vmatprep.mubr.f32.mxu0 0.0
    %450 = vmatmul.mubr.f32.gmra.mrb[0].mxu0 %v29
    %v451 = vpop.f32.mrb[0].mxu0
    %v452 = vadd.f32 %v379, %v451
    %v453 = vpop.f32.mrb[0].mxu0
    %454 = vdwg.mxu0
    %v455 = vmul.f32 %v200, %v447
    %v456 = vmul.f32 %v201, %v452
    %v457 = vmul.f32 %v202, %v447
    %v458 = vmul.f32 %v203, %v452
    %v459 = vmul.f32 %v204, %v447
    %v460 = vmul.f32 %v205, %v452
    %v461 = vmul.f32 %v206, %v447
    %v462 = vmul.f32 %v207, %v452
    %v463 = vld [vmem:[%s1 + $0x60] sm:$0xff]
    %v464 = vld [vmem:[%s1 + $0x68] sm:$0xff]
    %v465 = vld [vmem:[%s1 + $0x70] sm:$0xff]
    %v466 = vld [vmem:[%s1 + $0x78] sm:$0xff]
    %v468 = vsel %vm24, %v455, 0
    %v471 = vsel %vm24, %v456, 0
    %v474 = vsel %vm24, %v457, 0
    %v477 = vsel %vm24, %v458, 0
    %v480 = vsel %vm24, %v459, 0
    %v483 = vsel %vm24, %v460, 0
    %v486 = vsel %vm24, %v461, 0
    %v489 = vsel %vm24, %v462, 0
    %491 = vmatprep.subr.mxu0 0.0
    %492 = vmatpush1.msra.mxu0 %v463
    %493 = vmatprep.subr.mxu0 0.0
    %494 = vmatpush1.msra.mxu0 %v464
    %495 = vmatprep.subr.mxu0 0.0
    %496 = vmatpush1.msra.mxu0 %v465
    %497 = vmatprep.subr.mxu0 0.0
    %498 = vmatpush1.msra.mxu0 %v466
    %499 = vmatprep.subr.mxu0 0.0
    %500 = vmatpush1.msra.mxu0 0.0
    %501 = vmatprep.subr.mxu0 0.0
    %502 = vmatpush1.msra.mxu0 0.0
    %503 = vmatprep.subr.mxu0 0.0
    %504 = vmatpush1.msra.mxu0 0.0
    %505 = vmatprep.subr.mxu0 0.0
    %506 = vmatpush1.msra.mxu0 0.0
    %507 = vmatprep.subr.mxu0 0.0
    %508 = vmatpush1.msra.mxu0 0.0
    %509 = vmatprep.subr.mxu0 0.0
    %510 = vmatpush1.msra.mxu0 0.0
    %511 = vmatprep.subr.mxu0 0.0
    %512 = vmatpush1.msra.mxu0 0.0
    %513 = vmatprep.subr.mxu0 0.0
    %514 = vmatpush1.msra.mxu0 0.0
    %515 = vmatprep.subr.mxu0 0.0
    %516 = vmatpush1.msra.mxu0 0.0
    %517 = vmatprep.subr.mxu0 0.0
    %518 = vmatpush1.msra.mxu0 0.0
    %519 = vmatprep.subr.mxu0 0.0
    %520 = vmatpush1.msra.mxu0 0.0
    %521 = vmatprep.subr.mxu0 0.0
    %522 = vmatpush1.msra.mxu0 0.0
    %523 = vmatprep.subr.mxu0 0.0
    %524 = vmatpush1.msra.mxu0 0.0
    %525 = vmatprep.subr.mxu0 0.0
    %526 = vmatpush1.msra.mxu0 0.0
    %527 = vmatprep.subr.mxu0 0.0
    %528 = vmatpush1.msra.mxu0 0.0
    %529 = vmatprep.subr.mxu0 0.0
    %530 = vmatpush1.msra.mxu0 0.0
    %531 = vmatprep.subr.mxu0 0.0
    %532 = vmatpush1.msra.mxu0 0.0
    %533 = vmatprep.subr.mxu0 0.0
    %534 = vmatpush1.msra.mxu0 0.0
    %535 = vmatprep.subr.mxu0 0.0
    %536 = vmatpush1.msra.mxu0 0.0
    %537 = vmatprep.subr.mxu0 0.0
    %538 = vmatpush1.msra.mxu0 0.0
    %539 = vmatprep.subr.mxu0 0.0
    %540 = vmatpush1.msra.mxu0 0.0
    %541 = vmatprep.subr.mxu0 0.0
    %542 = vmatpush1.msra.mxu0 0.0
    %543 = vmatprep.subr.mxu0 0.0
    %544 = vmatpush1.msra.mxu0 0.0
    %545 = vmatprep.subr.mxu0 0.0
    %546 = vmatpush1.msra.mxu0 0.0
    %547 = vmatprep.subr.mxu0 0.0
    %548 = vmatpush1.msra.mxu0 0.0
    %549 = vmatprep.subr.mxu0 0.0
    %550 = vmatpush1.msra.mxu0 0.0
    %551 = vmatprep.subr.mxu0 0.0
    %552 = vmatpush1.msra.mxu0 0.0
    %553 = vmatprep.subr.mxu0 0.0
    %554 = vmatpush1.msra.mxu0 0.0
    %555 = vmatprep.mubr.f32.mxu0 0.0
    %556 = vmatmul.mubr.f32.gmra.mrb[0].mxu0 %v468
    %v557 = vpop.f32.mrb[0].mxu0
    %v558 = vadd.f32 0.0, %v557
    %v559 = vpop.f32.mrb[0].mxu0
    %560 = vmatprep.mubr.f32.mxu0 0.0
    %561 = vmatmul.mubr.f32.gmra.mrb[0].mxu0 %v471
    %v562 = vpop.f32.mrb[0].mxu0
    %v563 = vadd.f32 0.0, %v562
    %v564 = vpop.f32.mrb[0].mxu0
    %565 = vmatprep.mubr.f32.mxu0 0.0
    %566 = vmatmul.mubr.f32.gmra.mrb[0].mxu0 %v474
    %v567 = vpop.f32.mrb[0].mxu0
    %v568 = vadd.f32 0.0, %v567
    %v569 = vpop.f32.mrb[0].mxu0
    %570 = vmatprep.mubr.f32.mxu0 0.0
    %571 = vmatmul.mubr.f32.gmra.mrb[0].mxu0 %v477
    %v572 = vpop.f32.mrb[0].mxu0
    %v573 = vadd.f32 0.0, %v572
    %v574 = vpop.f32.mrb[0].mxu0
    %575 = vmatprep.mubr.f32.mxu0 0.0
    %576 = vmatmul.mubr.f32.gmra.mrb[0].mxu0 %v480
    %v577 = vpop.f32.mrb[0].mxu0
    %v578 = vadd.f32 0.0, %v577
    %v579 = vpop.f32.mrb[0].mxu0
    %580 = vmatprep.mubr.f32.mxu0 0.0
    %581 = vmatmul.mubr.f32.gmra.mrb[0].mxu0 %v483
    %v582 = vpop.f32.mrb[0].mxu0
    %v583 = vadd.f32 0.0, %v582
    %v584 = vpop.f32.mrb[0].mxu0
    %585 = vmatprep.mubr.f32.mxu0 0.0
    %586 = vmatmul.mubr.f32.gmra.mrb[0].mxu0 %v486
    %v587 = vpop.f32.mrb[0].mxu0
    %v588 = vadd.f32 0.0, %v587
    %v589 = vpop.f32.mrb[0].mxu0
    %590 = vmatprep.mubr.f32.mxu0 0.0
    %591 = vmatmul.mubr.f32.gmra.mrb[0].mxu0 %v489
    %v592 = vpop.f32.mrb[0].mxu0
    %v593 = vadd.f32 0.0, %v592
    %v594 = vpop.f32.mrb[0].mxu0
    %595 = vdwg.mxu0
    %v596 = vsel %vm24, %v558, -inf
    %v597 = vsel %vm24, %v568, -inf
    %v598 = vsel %vm24, %v578, -inf
    %v599 = vmax.f32 %v596, %v598
    %v600 = vsel %vm24, %v588, -inf
    %v601 = vmax.f32 %v597, %v600
    %v602 = vmax.f32 %v599, %v601
    %v603 = vsel %vm24, %v563, -inf
    %v604 = vsel %vm24, %v573, -inf
    %v605 = vsel %vm24, %v583, -inf
    %v606 = vmax.f32 %v603, %v605
    %v607 = vsel %vm24, %v593, -inf
    %v608 = vmax.f32 %v604, %v607
    %v609 = vmax.f32 %v606, %v608
    %v610 = vsub.f32 %v558, %v602
    %v611 = vsub.f32 %v563, %v609
    %v612 = vsub.f32 %v568, %v602
    %v613 = vsub.f32 %v573, %v609
    %v614 = vsub.f32 %v578, %v602
    %v615 = vsub.f32 %v583, %v609
    %v616 = vsub.f32 %v588, %v602
    %v617 = vsub.f32 %v593, %v609
    %v618 = vmul.f32 %v610, 1.442695
    %v619 = vpow.pop %v618
    %v620 = vmul.f32 %v611, 1.442695
    %v621 = vpow.pop %v620
    %v622 = vmul.f32 %v612, 1.442695
    %v623 = vpow.pop %v622
    %v624 = vmul.f32 %v613, 1.442695
    %v625 = vpow.pop %v624
    %v626 = vmul.f32 %v614, 1.442695
    %v627 = vpow.pop %v626
    %v628 = vmul.f32 %v615, 1.442695
    %v629 = vpow.pop %v628
    %v630 = vmul.f32 %v616, 1.442695
    %v631 = vpow.pop %v630
    %v632 = vmul.f32 %v617, 1.442695
    %v633 = vpow.pop %v632
    %v634 = vsel %vm24, %v619, 0.0
    %v635 = vsel %vm24, %v623, 0.0
    %v636 = vadd.f32 %v634, %v635
    %v637 = vsel %vm24, %v627, 0.0
    %v638 = vadd.f32 %v636, %v637
    %v639 = vsel %vm24, %v631, 0.0
    %v640 = vadd.f32 %v638, %v639
    %v641 = vsel %vm24, %v621, 0.0
    %v642 = vsel %vm24, %v625, 0.0
    %v643 = vadd.f32 %v641, %v642
    %v644 = vsel %vm24, %v629, 0.0
    %v645 = vadd.f32 %v643, %v644
    %v646 = vsel %vm24, %v633, 0.0
    %v647 = vadd.f32 %v645, %v646
    %v648 = vrcp.pop %v640
    %v649 = vmul.f32 %v619, %v648
    %v650 = vrcp.pop %v647
    %v651 = vmul.f32 %v621, %v650
    %v652 = vmul.f32 %v623, %v648
    %v653 = vmul.f32 %v625, %v650
    %v654 = vmul.f32 %v627, %v648
    %v655 = vmul.f32 %v629, %v650
    %v656 = vmul.f32 %v631, %v648
    %v657 = vmul.f32 %v633, %v650
    %v658 = vmul.f32 %v649, %v363
    %v659 = vmul.f32 %v651, %v364
    %v660 = vmul.f32 %v652, %v365
    %v661 = vmul.f32 %v653, %v366
    %v662 = vmul.f32 %v654, %v367
    %v663 = vmul.f32 %v655, %v368
    %v664 = vmul.f32 %v656, %v369
    %v665 = vmul.f32 %v657, %v370
    %v666 = vsel %vm24, %v658, 0.0
    %v667 = vsel %vm24, %v660, 0.0
    %v668 = vadd.f32 %v666, %v667
    %v669 = vsel %vm24, %v662, 0.0
    %v670 = vadd.f32 %v668, %v669
    %v671 = vsel %vm24, %v664, 0.0
    %v672 = vadd.f32 %v670, %v671
    %v673 = vsel %vm24, %v659, 0.0
    %v674 = vsel %vm24, %v661, 0.0
    %v675 = vadd.f32 %v673, %v674
    %v676 = vsel %vm24, %v663, 0.0
    %v677 = vadd.f32 %v675, %v676
    %v678 = vsel %vm24, %v665, 0.0
    %v679 = vadd.f32 %v677, %v678
    %v680 = vld [vmem:[%s1 + $0x80] sm:$0xff]
    %v681 = vld [vmem:[%s1 + $0x88] sm:$0xff]
    %v682 = vld [vmem:[%s1 + $0x90] sm:$0xff]
    %v683 = vld [vmem:[%s1 + $0x98] sm:$0xff]
    %v684 = vld [vmem:[%s1 + $0xa9] sm:$0x1]
    %v685 = vlaneseq
    %v686 = vshrl.u32 %v685, 7
    %v687 = vsub.s32 0, %v686
    %v688 = vrot.slane %v684, %v687
    %v690 = vsel %vm24, %v672, 0
    %v693 = vsel %vm24, %v679, 0
    %695 = vmatprep.subr.mxu0 0.0
    %696 = vmatpush1.msra.mxu0 %v680
    %697 = vmatprep.subr.mxu0 0.0
    %698 = vmatpush1.msra.mxu0 %v681
    %699 = vmatprep.subr.mxu0 0.0
    %700 = vmatpush1.msra.mxu0 %v682
    %701 = vmatprep.subr.mxu0 0.0
    %702 = vmatpush1.msra.mxu0 %v683
    %703 = vmatprep.subr.mxu0 0.0
    %704 = vmatpush1.msra.mxu0 0.0
    %705 = vmatprep.subr.mxu0 0.0
    %706 = vmatpush1.msra.mxu0 0.0
    %707 = vmatprep.subr.mxu0 0.0
    %708 = vmatpush1.msra.mxu0 0.0
    %709 = vmatprep.subr.mxu0 0.0
    %710 = vmatpush1.msra.mxu0 0.0
    %711 = vmatprep.subr.mxu0 0.0
    %712 = vmatpush1.msra.mxu0 0.0
    %713 = vmatprep.subr.mxu0 0.0
    %714 = vmatpush1.msra.mxu0 0.0
    %715 = vmatprep.subr.mxu0 0.0
    %716 = vmatpush1.msra.mxu0 0.0
    %717 = vmatprep.subr.mxu0 0.0
    %718 = vmatpush1.msra.mxu0 0.0
    %719 = vmatprep.subr.mxu0 0.0
    %720 = vmatpush1.msra.mxu0 0.0
    %721 = vmatprep.subr.mxu0 0.0
    %722 = vmatpush1.msra.mxu0 0.0
    %723 = vmatprep.subr.mxu0 0.0
    %724 = vmatpush1.msra.mxu0 0.0
    %725 = vmatprep.subr.mxu0 0.0
    %726 = vmatpush1.msra.mxu0 0.0
    %727 = vmatprep.subr.mxu0 0.0
    %728 = vmatpush1.msra.mxu0 0.0
    %729 = vmatprep.subr.mxu0 0.0
    %730 = vmatpush1.msra.mxu0 0.0
    %731 = vmatprep.subr.mxu0 0.0
    %732 = vmatpush1.msra.mxu0 0.0
    %733 = vmatprep.subr.mxu0 0.0
    %734 = vmatpush1.msra.mxu0 0.0
    %735 = vmatprep.subr.mxu0 0.0
    %736 = vmatpush1.msra.mxu0 0.0
    %737 = vmatprep.subr.mxu0 0.0
    %738 = vmatpush1.msra.mxu0 0.0
    %739 = vmatprep.subr.mxu0 0.0
    %740 = vmatpush1.msra.mxu0 0.0
    %741 = vmatprep.subr.mxu0 0.0
    %742 = vmatpush1.msra.mxu0 0.0
    %743 = vmatprep.subr.mxu0 0.0
    %744 = vmatpush1.msra.mxu0 0.0
    %745 = vmatprep.subr.mxu0 0.0
    %746 = vmatpush1.msra.mxu0 0.0
    %747 = vmatprep.subr.mxu0 0.0
    %748 = vmatpush1.msra.mxu0 0.0
    %749 = vmatprep.subr.mxu0 0.0
    %750 = vmatpush1.msra.mxu0 0.0
    %751 = vmatprep.subr.mxu0 0.0
    %752 = vmatpush1.msra.mxu0 0.0
    %753 = vmatprep.subr.mxu0 0.0
    %754 = vmatpush1.msra.mxu0 0.0
    %755 = vmatprep.subr.mxu0 0.0
    %756 = vmatpush1.msra.mxu0 0.0
    %757 = vmatprep.subr.mxu0 0.0
    %758 = vmatpush1.msra.mxu0 0.0
    %759 = vmatprep.mubr.f32.mxu0 0.0
    %760 = vmatmul.mubr.f32.gmra.mrb[0].mxu0 %v690
    %v761 = vpop.f32.mrb[0].mxu0
    %v762 = vadd.f32 %v688, %v761
    %v763 = vpop.f32.mrb[0].mxu0
    %764 = vmatprep.mubr.f32.mxu0 0.0
    %765 = vmatmul.mubr.f32.gmra.mrb[0].mxu0 %v693
    %v766 = vpop.f32.mrb[0].mxu0
    %v767 = vadd.f32 %v688, %v766
    %v768 = vpop.f32.mrb[0].mxu0
    %769 = vdwg.mxu0
    %v770 = vsel %vm24, %v762, 0.0
    %771 = vadd.xlane.f32.xlu0 %v770
    %v772 = vpop.xlane.xlu0 %771
    %v773 = vsel %vm24, %v767, 0.0
    %774 = vadd.xlane.f32.xlu0 %v773
    %v775 = vpop.xlane.xlu0 %774
    %v776 = vrcp.pop 32.0
    %v777 = vmul.f32 %v772, %v776
    %v778 = vmul.f32 %v775, %v776
    %v779 = vsub.f32 %v762, %v777
    %v780 = vsub.f32 %v767, %v778
    %v781 = vmul.f32 %v779, %v779
    %v782 = vmul.f32 %v780, %v780
    %v783 = vsel %vm24, %v781, 0.0
    %784 = vadd.xlane.f32.xlu0 %v783
    %v785 = vpop.xlane.xlu0 %784
    %v786 = vsel %vm24, %v782, 0.0
    %787 = vadd.xlane.f32.xlu0 %v786
    %v788 = vpop.xlane.xlu0 %787
    %v789 = vmul.f32 %v785, %v776
    %v790 = vmul.f32 %v788, %v776
    %v791 = vadd.f32 %v789, 1e-05
    %v792 = vadd.f32 %v790, 1e-05
    %v793 = vrsqrt.pop %v791
    %v794 = vrsqrt.pop %v792
    %v795 = vmul.f32 %v779, %v793
    %v796 = vmul.f32 %v780, %v794
    %v797 = vld [vmem:[%s1 + $0xaa] sm:$0x1]
    %v798 = vlaneseq
    %v799 = vshrl.u32 %v798, 7
    %v800 = vsub.s32 0, %v799
    %v801 = vrot.slane %v797, %v800
    %v802 = vmul.f32 %v795, %v801
    %v803 = vmul.f32 %v796, %v801
    %v804 = vld [vmem:[%s1 + $0xab] sm:$0x1]
    %v805 = vlaneseq
    %v806 = vshrl.u32 %v805, 7
    %v807 = vsub.s32 0, %v806
    %v808 = vrot.slane %v804, %v807
    %v809 = vadd.f32 %v802, %v808
    %v810 = vadd.f32 %v803, %v808
    %811 = vst.msk [vmem:[#allocation2] sm:$0xff] %vm24, %v809
    %812 = vst.msk [vmem:[#allocation2 + $0x8] sm:$0xff] %vm24, %v810
    // Predicated region
    $region10: #{tpu_custom_call.1} parent=1 // pred_check
      _
    $region11: #{tpu_custom_call.1} parent=1 // pred_check_branch
      %814 = sbr.rel (0) target = $region13
    $region12: #{tpu_custom_call.1} parent=1 // pred_region
      %s816 = ssub.s32 256, 256
      %817 = vsyncadd [#allocation3], %s816
      %s818 = sshll.u32 [#allocation2], 4
      %s819 = int_to_ptr.vmem [resolvable:$true] %s818
      %824 = dma.vmem_to_hbm [thread:$0]  %s819, 256, %s2, [#allocation3], 128, 128, 8
    $region13: #{tpu_custom_call.1} parent=1 // pred_fallthru
      _
    // Predicated region
    $region14: #{tpu_custom_call.1} parent=1 // pred_check
      _
    $region15: #{tpu_custom_call.1} parent=1 // pred_check_branch
      %826 = sbr.rel (0) target = $region17
    $region16: #{tpu_custom_call.1} parent=1 // pred_region
      %827 = dma.done [#allocation3], 256
    $region17: #{tpu_custom_call.1} parent=1 // pred_fallthru
      _
    %828 = vsyncpa [#allocation3], 1

// kernel: tpu_custom_call.1
$region0: #{tpu_custom_call.1}
  #allocation0 [shape = 'u32[]', space=smem, size = 0x4, offset = 0x4, fixed_abs, tag = 'smem constant byte address 0x4 - core index']
  #allocation1 [shape = 'u32[144,128]{1,0:T(1,128)}', space=vmem, size = 0x12000, scoped, tag = 'internal scratch']
  %s0 = inlined_call_operand.vmem [shape: f32[4,16,32], index: 0, kind: input, shape index: {}]
  %s1 = inlined_call_operand.vmem [shape: f32[172,32], index: 1, kind: input, shape index: {}]
  %s2 = inlined_call_operand.hbm [shape: f32[16,32], index: 2, kind: output, shape index: {}]
  %s3 = sld [smem:[#allocation0]]
  $region18: #{tpu_custom_call.1} parent=0
    _
  %s5 = ssub.s32 1, %s3
  %s6 = scalar_select 0, %s5, %s3
  $region1: #{tpu_custom_call.1} parent=0
    #allocation2 [shape = 'u8[8192]{0}', space=vmem, size = 0x2000, scoped, tag = 'output window, operand 0, single buffered']
    #allocation3 [shape = 's32[1]{0}', space=sflag, size = 0x4, scoped, tag = 'scoped memory for tpu_custom_call.1']
    %7 = vsyncpa [#allocation3], 0
    // Predicated region
    $region2: #{tpu_custom_call.1} parent=1 // pred_check
      _
    $region3: #{tpu_custom_call.1} parent=1 // pred_check_branch
      %9 = sbr.rel (0) target = $region5
    $region4: #{tpu_custom_call.1} parent=1 // pred_region
      _
    $region5: #{tpu_custom_call.1} parent=1 // pred_fallthru
      _
    // Predicated region
    $region6: #{tpu_custom_call.1} parent=1 // pred_check
      _
    $region7: #{tpu_custom_call.1} parent=1 // pred_check_branch
      %11 = sbr.rel (0) target = $region9
    $region8: #{tpu_custom_call.1} parent=1 // pred_region
      _
    $region9: #{tpu_custom_call.1} parent=1 // pred_fallthru
      _
    %v12 = vld [vmem:[%s0] sm:$0xff]
    %v13 = vld [vmem:[%s0 + $0x8] sm:$0xff]
    %v14 = vld [vmem:[%s0 + $0x10] sm:$0xff]
    %v15 = vld [vmem:[%s0 + $0x18] sm:$0xff]
    %v16 = vld [vmem:[%s0 + $0x20] sm:$0xff]
    %v17 = vld [vmem:[%s0 + $0x28] sm:$0xff]
    %v18 = vld [vmem:[%s0 + $0x30] sm:$0xff]
    %v19 = vld [vmem:[%s0 + $0x38] sm:$0xff]
    %v20 = vld [vmem:[%s1 + $0x20] sm:$0xff]
    %v21 = vld [vmem:[%s1 + $0x28] sm:$0xff]
    %v22 = vld [vmem:[%s1 + $0x30] sm:$0xff]
    %v23 = vld [vmem:[%s1 + $0x38] sm:$0xff]
    %vm24 = vcmask 261120
    %v26 = vsel %vm24, %v12, 0
    %v29 = vsel %vm24, %v13, 0
    %v32 = vsel %vm24, %v14, 0
    %v35 = vsel %vm24, %v15, 0
    %v38 = vsel %vm24, %v16, 0
    %v41 = vsel %vm24, %v17, 0
    %v44 = vsel %vm24, %v18, 0
    %v47 = vsel %vm24, %v19, 0
    %49 = vmatprep.subr.mxu0 0.0
    %50 = vmatpush1.msra.mxu0 %v20
    %51 = vmatprep.subr.mxu0 0.0
    %52 = vmatpush1.msra.mxu0 %v21
    %53 = vmatprep.subr.mxu0 0.0
    %54 = vmatpush1.msra.mxu0 %v22
    %55 = vmatprep.subr.mxu0 0.0
    %56 = vmatpush1.msra.mxu0 %v23
    %57 = vmatprep.subr.mxu0 0.0
    %58 = vmatpush1.msra.mxu0 0.0
    %59 = vmatprep.subr.mxu0 0.0
    %60 = vmatpush1.msra.mxu0 0.0
    %61 = vmatprep.subr.mxu0 0.0
    %62 = vmatpush1.msra.mxu0 0.0
    %63 = vmatprep.subr.mxu0 0.0
    %64 = vmatpush1.msra.mxu0 0.0
    %65 = vmatprep.subr.mxu0 0.0
    %66 = vmatpush1.msra.mxu0 0.0
    %67 = vmatprep.subr.mxu0 0.0
    %68 = vmatpush1.msra.mxu0 0.0
    %69 = vmatprep.subr.mxu0 0.0
    %70 = vmatpush1.msra.mxu0 0.0
    %71 = vmatprep.subr.mxu0 0.0
    %72 = vmatpush1.msra.mxu0 0.0
    %73 = vmatprep.subr.mxu0 0.0
    %74 = vmatpush1.msra.mxu0 0.0
    %75 = vmatprep.subr.mxu0 0.0
    %76 = vmatpush1.msra.mxu0 0.0
    %77 = vmatprep.subr.mxu0 0.0
    %78 = vmatpush1.msra.mxu0 0.0
    %79 = vmatprep.subr.mxu0 0.0
    %80 = vmatpush1.msra.mxu0 0.0
    %81 = vmatprep.subr.mxu0 0.0
    %82 = vmatpush1.msra.mxu0 0.0
    %83 = vmatprep.subr.mxu0 0.0
    %84 = vmatpush1.msra.mxu0 0.0
    %85 = vmatprep.subr.mxu0 0.0
    %86 = vmatpush1.msra.mxu0 0.0
    %87 = vmatprep.subr.mxu0 0.0
    %88 = vmatpush1.msra.mxu0 0.0
    %89 = vmatprep.subr.mxu0 0.0
    %90 = vmatpush1.msra.mxu0 0.0
    %91 = vmatprep.subr.mxu0 0.0
    %92 = vmatpush1.msra.mxu0 0.0
    %93 = vmatprep.subr.mxu0 0.0
    %94 = vmatpush1.msra.mxu0 0.0
    %95 = vmatprep.subr.mxu0 0.0
    %96 = vmatpush1.msra.mxu0 0.0
    %97 = vmatprep.subr.mxu0 0.0
    %98 = vmatpush1.msra.mxu0 0.0
    %99 = vmatprep.subr.mxu0 0.0
    %100 = vmatpush1.msra.mxu0 0.0
    %101 = vmatprep.subr.mxu0 0.0
    %102 = vmatpush1.msra.mxu0 0.0
    %103 = vmatprep.subr.mxu0 0.0
    %104 = vmatpush1.msra.mxu0 0.0
    %105 = vmatprep.subr.mxu0 0.0
    %106 = vmatpush1.msra.mxu0 0.0
    %107 = vmatprep.subr.mxu0 0.0
    %108 = vmatpush1.msra.mxu0 0.0
    %109 = vmatprep.subr.mxu0 0.0
    %110 = vmatpush1.msra.mxu0 0.0
    %111 = vmatprep.subr.mxu0 0.0
    %112 = vmatpush1.msra.mxu0 0.0
    %113 = vmatprep.mubr.f32.mxu0 0.0
    %114 = vmatmul.mubr.f32.gmra.mrb[0].mxu0 %v26
    %v115 = vpop.f32.mrb[0].mxu0
    %v116 = vadd.f32 0.0, %v115
    %v117 = vpop.f32.mrb[0].mxu0
    %118 = vmatprep.mubr.f32.mxu0 0.0
    %119 = vmatmul.mubr.f32.gmra.mrb[0].mxu0 %v29
    %v120 = vpop.f32.mrb[0].mxu0
    %v121 = vadd.f32 0.0, %v120
    %v122 = vpop.f32.mrb[0].mxu0
    %123 = vmatprep.mubr.f32.mxu0 0.0
    %124 = vmatmul.mubr.f32.gmra.mrb[0].mxu0 %v32
    %v125 = vpop.f32.mrb[0].mxu0
    %v126 = vadd.f32 0.0, %v125
    %v127 = vpop.f32.mrb[0].mxu0
    %128 = vmatprep.mubr.f32.mxu0 0.0
    %129 = vmatmul.mubr.f32.gmra.mrb[0].mxu0 %v35
    %v130 = vpop.f32.mrb[0].mxu0
    %v131 = vadd.f32 0.0, %v130
    %v132 = vpop.f32.mrb[0].mxu0
    %133 = vmatprep.mubr.f32.mxu0 0.0
    %134 = vmatmul.mubr.f32.gmra.mrb[0].mxu0 %v38
    %v135 = vpop.f32.mrb[0].mxu0
    %v136 = vadd.f32 0.0, %v135
    %v137 = vpop.f32.mrb[0].mxu0
    %138 = vmatprep.mubr.f32.mxu0 0.0
    %139 = vmatmul.mubr.f32.gmra.mrb[0].mxu0 %v41
    %v140 = vpop.f32.mrb[0].mxu0
    %v141 = vadd.f32 0.0, %v140
    %v142 = vpop.f32.mrb[0].mxu0
    %143 = vmatprep.mubr.f32.mxu0 0.0
    %144 = vmatmul.mubr.f32.gmra.mrb[0].mxu0 %v44
    %v145 = vpop.f32.mrb[0].mxu0
    %v146 = vadd.f32 0.0, %v145
    %v147 = vpop.f32.mrb[0].mxu0
    %148 = vmatprep.mubr.f32.mxu0 0.0
    %149 = vmatmul.mubr.f32.gmra.mrb[0].mxu0 %v47
    %v150 = vpop.f32.mrb[0].mxu0
    %v151 = vadd.f32 0.0, %v150
    %v152 = vpop.f32.mrb[0].mxu0
    %153 = vdwg.mxu0
    %v154 = vld [vmem:[%s1 + $0xa1] sm:$0xf]
    %v157 = vunpack.c.l.s4 1966171168
    %v158 = vunpack.c.0.s8 %v157
    %v159 = vlaneseq
    %v160 = vshrl.u32 %v159, 7
    %v161 = vsub.s32 %v158, %v160
    %v162 = vrot.slane %v154, %v161
    %v163 = vcombine.high %v162, %v162
    %v165 = vunpack.c.l.s4 1966171168
    %v166 = vunpack.c.0.s8 %v165
    %v167 = vlaneseq
    %v168 = vshrl.u32 %v167, 7
    %v169 = vsub.s32 %v166, %v168
    %v170 = vrot.slane %v162, %v169
    %v172 = vunpack.c.l.s4 1966171168
    %v173 = vunpack.c.0.s8 %v172
    %v174 = vlaneseq
    %v175 = vshrl.u32 %v174, 7
    %v176 = vsub.s32 %v173, %v175
    %v177 = vrot.slane %v163, %v176
    %v178 = vcombine.high %v170, %v170
    %v179 = vcombine.high %v177, %v177
    %v180 = vlaneseq
    %v181 = vshrl.u32 %v180, 7
    %v182 = vsub.s32 0, %v181
    %v183 = vrot.slane %v170, %v182
    %v184 = vlaneseq
    %v185 = vshrl.u32 %v184, 7
    %v186 = vsub.s32 0, %v185
    %v187 = vrot.slane %v177, %v186
    %v188 = vlaneseq
    %v189 = vshrl.u32 %v188, 7
    %v190 = vsub.s32 0, %v189
    %v191 = vrot.slane %v178, %v190
    %v192 = vlaneseq
    %v193 = vshrl.u32 %v192, 7
    %v194 = vsub.s32 0, %v193
    %v195 = vrot.slane %v179, %v194
    %v200 = vadd.f32 %v116, %v183
    %v201 = vadd.f32 %v121, %v183
    %v202 = vadd.f32 %v126, %v187
    %v203 = vadd.f32 %v131, %v187
    %v204 = vadd.f32 %v136, %v191
    %v205 = vadd.f32 %v141, %v191
    %v206 = vadd.f32 %v146, %v195
    %v207 = vadd.f32 %v151, %v195
    %v208 = vld [vmem:[%s1 + $0x40] sm:$0xff]
    %v209 = vld [vmem:[%s1 + $0x48] sm:$0xff]
    %v210 = vld [vmem:[%s1 + $0x50] sm:$0xff]
    %v211 = vld [vmem:[%s1 + $0x58] sm:$0xff]
    %212 = vmatprep.subr.mxu0 0.0
    %213 = vmatpush1.msra.mxu0 %v208
    %214 = vmatprep.subr.mxu0 0.0
    %215 = vmatpush1.msra.mxu0 %v209
    %216 = vmatprep.subr.mxu0 0.0
    %217 = vmatpush1.msra.mxu0 %v210
    %218 = vmatprep.subr.mxu0 0.0
    %219 = vmatpush1.msra.mxu0 %v211
    %220 = vmatprep.subr.mxu0 0.0
    %221 = vmatpush1.msra.mxu0 0.0
    %222 = vmatprep.subr.mxu0 0.0
    %223 = vmatpush1.msra.mxu0 0.0
    %224 = vmatprep.subr.mxu0 0.0
    %225 = vmatpush1.msra.mxu0 0.0
    %226 = vmatprep.subr.mxu0 0.0
    %227 = vmatpush1.msra.mxu0 0.0
    %228 = vmatprep.subr.mxu0 0.0
    %229 = vmatpush1.msra.mxu0 0.0
    %230 = vmatprep.subr.mxu0 0.0
    %231 = vmatpush1.msra.mxu0 0.0
    %232 = vmatprep.subr.mxu0 0.0
    %233 = vmatpush1.msra.mxu0 0.0
    %234 = vmatprep.subr.mxu0 0.0
    %235 = vmatpush1.msra.mxu0 0.0
    %236 = vmatprep.subr.mxu0 0.0
    %237 = vmatpush1.msra.mxu0 0.0
    %238 = vmatprep.subr.mxu0 0.0
    %239 = vmatpush1.msra.mxu0 0.0
    %240 = vmatprep.subr.mxu0 0.0
    %241 = vmatpush1.msra.mxu0 0.0
    %242 = vmatprep.subr.mxu0 0.0
    %243 = vmatpush1.msra.mxu0 0.0
    %244 = vmatprep.subr.mxu0 0.0
    %245 = vmatpush1.msra.mxu0 0.0
    %246 = vmatprep.subr.mxu0 0.0
    %247 = vmatpush1.msra.mxu0 0.0
    %248 = vmatprep.subr.mxu0 0.0
    %249 = vmatpush1.msra.mxu0 0.0
    %250 = vmatprep.subr.mxu0 0.0
    %251 = vmatpush1.msra.mxu0 0.0
    %252 = vmatprep.subr.mxu0 0.0
    %253 = vmatpush1.msra.mxu0 0.0
    %254 = vmatprep.subr.mxu0 0.0
    %255 = vmatpush1.msra.mxu0 0.0
    %256 = vmatprep.subr.mxu0 0.0
    %257 = vmatpush1.msra.mxu0 0.0
    %258 = vmatprep.subr.mxu0 0.0
    %259 = vmatpush1.msra.mxu0 0.0
    %260 = vmatprep.subr.mxu0 0.0
    %261 = vmatpush1.msra.mxu0 0.0
    %262 = vmatprep.subr.mxu0 0.0
    %263 = vmatpush1.msra.mxu0 0.0
    %264 = vmatprep.subr.mxu0 0.0
    %265 = vmatpush1.msra.mxu0 0.0
    %266 = vmatprep.subr.mxu0 0.0
    %267 = vmatpush1.msra.mxu0 0.0
    %268 = vmatprep.subr.mxu0 0.0
    %269 = vmatpush1.msra.mxu0 0.0
    %270 = vmatprep.subr.mxu0 0.0
    %271 = vmatpush1.msra.mxu0 0.0
    %272 = vmatprep.subr.mxu0 0.0
    %273 = vmatpush1.msra.mxu0 0.0
    %274 = vmatprep.subr.mxu0 0.0
    %275 = vmatpush1.msra.mxu0 0.0
    %276 = vmatprep.mubr.f32.mxu0 0.0
    %277 = vmatmul.mubr.f32.gmra.mrb[0].mxu0 %v26
    %v278 = vpop.f32.mrb[0].mxu0
    %v279 = vadd.f32 0.0, %v278
    %v280 = vpop.f32.mrb[0].mxu0
    %281 = vmatprep.mubr.f32.mxu0 0.0
    %282 = vmatmul.mubr.f32.gmra.mrb[0].mxu0 %v29
    %v283 = vpop.f32.mrb[0].mxu0
    %v284 = vadd.f32 0.0, %v283
    %v285 = vpop.f32.mrb[0].mxu0
    %286 = vmatprep.mubr.f32.mxu0 0.0
    %287 = vmatmul.mubr.f32.gmra.mrb[0].mxu0 %v32
    %v288 = vpop.f32.mrb[0].mxu0
    %v289 = vadd.f32 0.0, %v288
    %v290 = vpop.f32.mrb[0].mxu0
    %291 = vmatprep.mubr.f32.mxu0 0.0
    %292 = vmatmul.mubr.f32.gmra.mrb[0].mxu0 %v35
    %v293 = vpop.f32.mrb[0].mxu0
    %v294 = vadd.f32 0.0, %v293
    %v295 = vpop.f32.mrb[0].mxu0
    %296 = vmatprep.mubr.f32.mxu0 0.0
    %297 = vmatmul.mubr.f32.gmra.mrb[0].mxu0 %v38
    %v298 = vpop.f32.mrb[0].mxu0
    %v299 = vadd.f32 0.0, %v298
    %v300 = vpop.f32.mrb[0].mxu0
    %301 = vmatprep.mubr.f32.mxu0 0.0
    %302 = vmatmul.mubr.f32.gmra.mrb[0].mxu0 %v41
    %v303 = vpop.f32.mrb[0].mxu0
    %v304 = vadd.f32 0.0, %v303
    %v305 = vpop.f32.mrb[0].mxu0
    %306 = vmatprep.mubr.f32.mxu0 0.0
    %307 = vmatmul.mubr.f32.gmra.mrb[0].mxu0 %v44
    %v308 = vpop.f32.mrb[0].mxu0
    %v309 = vadd.f32 0.0, %v308
    %v310 = vpop.f32.mrb[0].mxu0
    %311 = vmatprep.mubr.f32.mxu0 0.0
    %312 = vmatmul.mubr.f32.gmra.mrb[0].mxu0 %v47
    %v313 = vpop.f32.mrb[0].mxu0
    %v314 = vadd.f32 0.0, %v313
    %v315 = vpop.f32.mrb[0].mxu0
    %316 = vdwg.mxu0
    %v317 = vld [vmem:[%s1 + $0xa5] sm:$0xf]
    %v320 = vunpack.c.l.s4 1966171168
    %v321 = vunpack.c.0.s8 %v320
    %v322 = vlaneseq
    %v323 = vshrl.u32 %v322, 7
    %v324 = vsub.s32 %v321, %v323
    %v325 = vrot.slane %v317, %v324
    %v326 = vcombine.high %v325, %v325
    %v328 = vunpack.c.l.s4 1966171168
    %v329 = vunpack.c.0.s8 %v328
    %v330 = vlaneseq
    %v331 = vshrl.u32 %v330, 7
    %v332 = vsub.s32 %v329, %v331
    %v333 = vrot.slane %v325, %v332
    %v335 = vunpack.c.l.s4 1966171168
    %v336 = vunpack.c.0.s8 %v335
    %v337 = vlaneseq
    %v338 = vshrl.u32 %v337, 7
    %v339 = vsub.s32 %v336, %v338
    %v340 = vrot.slane %v326, %v339
    %v341 = vcombine.high %v333, %v333
    %v342 = vcombine.high %v340, %v340
    %v343 = vlaneseq
    %v344 = vshrl.u32 %v343, 7
    %v345 = vsub.s32 0, %v344
    %v346 = vrot.slane %v333, %v345
    %v347 = vlaneseq
    %v348 = vshrl.u32 %v347, 7
    %v349 = vsub.s32 0, %v348
    %v350 = vrot.slane %v340, %v349
    %v351 = vlaneseq
    %v352 = vshrl.u32 %v351, 7
    %v353 = vsub.s32 0, %v352
    %v354 = vrot.slane %v341, %v353
    %v355 = vlaneseq
    %v356 = vshrl.u32 %v355, 7
    %v357 = vsub.s32 0, %v356
    %v358 = vrot.slane %v342, %v357
    %v363 = vadd.f32 %v279, %v346
    %v364 = vadd.f32 %v284, %v346
    %v365 = vadd.f32 %v289, %v350
    %v366 = vadd.f32 %v294, %v350
    %v367 = vadd.f32 %v299, %v354
    %v368 = vadd.f32 %v304, %v354
    %v369 = vadd.f32 %v309, %v358
    %v370 = vadd.f32 %v314, %v358
    %v371 = vld [vmem:[%s1] sm:$0xff]
    %v372 = vld [vmem:[%s1 + $0x8] sm:$0xff]
    %v373 = vld [vmem:[%s1 + $0x10] sm:$0xff]
    %v374 = vld [vmem:[%s1 + $0x18] sm:$0xff]
    %v375 = vld [vmem:[%s1 + $0xa0] sm:$0x1]
    %v376 = vlaneseq
    %v377 = vshrl.u32 %v376, 7
    %v378 = vsub.s32 0, %v377
    %v379 = vrot.slane %v375, %v378
    %380 = vmatprep.subr.mxu0 0.0
    %381 = vmatpush1.msra.mxu0 %v371
    %382 = vmatprep.subr.mxu0 0.0
    %383 = vmatpush1.msra.mxu0 %v372
    %384 = vmatprep.subr.mxu0 0.0
    %385 = vmatpush1.msra.mxu0 %v373
    %386 = vmatprep.subr.mxu0 0.0
    %387 = vmatpush1.msra.mxu0 %v374
    %388 = vmatprep.subr.mxu0 0.0
    %389 = vmatpush1.msra.mxu0 0.0
    %390 = vmatprep.subr.mxu0 0.0
    %391 = vmatpush1.msra.mxu0 0.0
    %392 = vmatprep.subr.mxu0 0.0
    %393 = vmatpush1.msra.mxu0 0.0
    %394 = vmatprep.subr.mxu0 0.0
    %395 = vmatpush1.msra.mxu0 0.0
    %396 = vmatprep.subr.mxu0 0.0
    %397 = vmatpush1.msra.mxu0 0.0
    %398 = vmatprep.subr.mxu0 0.0
    %399 = vmatpush1.msra.mxu0 0.0
    %400 = vmatprep.subr.mxu0 0.0
    %401 = vmatpush1.msra.mxu0 0.0
    %402 = vmatprep.subr.mxu0 0.0
    %403 = vmatpush1.msra.mxu0 0.0
    %404 = vmatprep.subr.mxu0 0.0
    %405 = vmatpush1.msra.mxu0 0.0
    %406 = vmatprep.subr.mxu0 0.0
    %407 = vmatpush1.msra.mxu0 0.0
    %408 = vmatprep.subr.mxu0 0.0
    %409 = vmatpush1.msra.mxu0 0.0
    %410 = vmatprep.subr.mxu0 0.0
    %411 = vmatpush1.msra.mxu0 0.0
    %412 = vmatprep.subr.mxu0 0.0
    %413 = vmatpush1.msra.mxu0 0.0
    %414 = vmatprep.subr.mxu0 0.0
    %415 = vmatpush1.msra.mxu0 0.0
    %416 = vmatprep.subr.mxu0 0.0
    %417 = vmatpush1.msra.mxu0 0.0
    %418 = vmatprep.subr.mxu0 0.0
    %419 = vmatpush1.msra.mxu0 0.0
    %420 = vmatprep.subr.mxu0 0.0
    %421 = vmatpush1.msra.mxu0 0.0
    %422 = vmatprep.subr.mxu0 0.0
    %423 = vmatpush1.msra.mxu0 0.0
    %424 = vmatprep.subr.mxu0 0.0
    %425 = vmatpush1.msra.mxu0 0.0
    %426 = vmatprep.subr.mxu0 0.0
    %427 = vmatpush1.msra.mxu0 0.0
    %428 = vmatprep.subr.mxu0 0.0
    %429 = vmatpush1.msra.mxu0 0.0
    %430 = vmatprep.subr.mxu0 0.0
    %431 = vmatpush1.msra.mxu0 0.0
    %432 = vmatprep.subr.mxu0 0.0
    %433 = vmatpush1.msra.mxu0 0.0
    %434 = vmatprep.subr.mxu0 0.0
    %435 = vmatpush1.msra.mxu0 0.0
    %436 = vmatprep.subr.mxu0 0.0
    %437 = vmatpush1.msra.mxu0 0.0
    %438 = vmatprep.subr.mxu0 0.0
    %439 = vmatpush1.msra.mxu0 0.0
    %440 = vmatprep.subr.mxu0 0.0
    %441 = vmatpush1.msra.mxu0 0.0
    %442 = vmatprep.subr.mxu0 0.0
    %443 = vmatpush1.msra.mxu0 0.0
    %444 = vmatprep.mubr.f32.mxu0 0.0
    %445 = vmatmul.mubr.f32.gmra.mrb[0].mxu0 %v26
    %v446 = vpop.f32.mrb[0].mxu0
    %v447 = vadd.f32 %v379, %v446
    %v448 = vpop.f32.mrb[0].mxu0
    %449 = vmatprep.mubr.f32.mxu0 0.0
    %450 = vmatmul.mubr.f32.gmra.mrb[0].mxu0 %v29
    %v451 = vpop.f32.mrb[0].mxu0
    %v452 = vadd.f32 %v379, %v451
    %v453 = vpop.f32.mrb[0].mxu0
    %454 = vdwg.mxu0
    %v455 = vmul.f32 %v200, %v447
    %v456 = vmul.f32 %v201, %v452
    %v457 = vmul.f32 %v202, %v447
    %v458 = vmul.f32 %v203, %v452
    %v459 = vmul.f32 %v204, %v447
    %v460 = vmul.f32 %v205, %v452
    %v461 = vmul.f32 %v206, %v447
    %v462 = vmul.f32 %v207, %v452
    %v463 = vld [vmem:[%s1 + $0x60] sm:$0xff]
    %v464 = vld [vmem:[%s1 + $0x68] sm:$0xff]
    %v465 = vld [vmem:[%s1 + $0x70] sm:$0xff]
    %v466 = vld [vmem:[%s1 + $0x78] sm:$0xff]
    %v468 = vsel %vm24, %v455, 0
    %v471 = vsel %vm24, %v456, 0
    %v474 = vsel %vm24, %v457, 0
    %v477 = vsel %vm24, %v458, 0
    %v480 = vsel %vm24, %v459, 0
    %v483 = vsel %vm24, %v460, 0
    %v486 = vsel %vm24, %v461, 0
    %v489 = vsel %vm24, %v462, 0
    %491 = vmatprep.subr.mxu0 0.0
    %492 = vmatpush1.msra.mxu0 %v463
    %493 = vmatprep.subr.mxu0 0.0
    %494 = vmatpush1.msra.mxu0 %v464
    %495 = vmatprep.subr.mxu0 0.0
    %496 = vmatpush1.msra.mxu0 %v465
    %497 = vmatprep.subr.mxu0 0.0
    %498 = vmatpush1.msra.mxu0 %v466
    %499 = vmatprep.subr.mxu0 0.0
    %500 = vmatpush1.msra.mxu0 0.0
    %501 = vmatprep.subr.mxu0 0.0
    %502 = vmatpush1.msra.mxu0 0.0
    %503 = vmatprep.subr.mxu0 0.0
    %504 = vmatpush1.msra.mxu0 0.0
    %505 = vmatprep.subr.mxu0 0.0
    %506 = vmatpush1.msra.mxu0 0.0
    %507 = vmatprep.subr.mxu0 0.0
    %508 = vmatpush1.msra.mxu0 0.0
    %509 = vmatprep.subr.mxu0 0.0
    %510 = vmatpush1.msra.mxu0 0.0
    %511 = vmatprep.subr.mxu0 0.0
    %512 = vmatpush1.msra.mxu0 0.0
    %513 = vmatprep.subr.mxu0 0.0
    %514 = vmatpush1.msra.mxu0 0.0
    %515 = vmatprep.subr.mxu0 0.0
    %516 = vmatpush1.msra.mxu0 0.0
    %517 = vmatprep.subr.mxu0 0.0
    %518 = vmatpush1.msra.mxu0 0.0
    %519 = vmatprep.subr.mxu0 0.0
    %520 = vmatpush1.msra.mxu0 0.0
    %521 = vmatprep.subr.mxu0 0.0
    %522 = vmatpush1.msra.mxu0 0.0
    %523 = vmatprep.subr.mxu0 0.0
    %524 = vmatpush1.msra.mxu0 0.0
    %525 = vmatprep.subr.mxu0 0.0
    %526 = vmatpush1.msra.mxu0 0.0
    %527 = vmatprep.subr.mxu0 0.0
    %528 = vmatpush1.msra.mxu0 0.0
    %529 = vmatprep.subr.mxu0 0.0
    %530 = vmatpush1.msra.mxu0 0.0
    %531 = vmatprep.subr.mxu0 0.0
    %532 = vmatpush1.msra.mxu0 0.0
    %533 = vmatprep.subr.mxu0 0.0
    %534 = vmatpush1.msra.mxu0 0.0
    %535 = vmatprep.subr.mxu0 0.0
    %536 = vmatpush1.msra.mxu0 0.0
    %537 = vmatprep.subr.mxu0 0.0
    %538 = vmatpush1.msra.mxu0 0.0
    %539 = vmatprep.subr.mxu0 0.0
    %540 = vmatpush1.msra.mxu0 0.0
    %541 = vmatprep.subr.mxu0 0.0
    %542 = vmatpush1.msra.mxu0 0.0
    %543 = vmatprep.subr.mxu0 0.0
    %544 = vmatpush1.msra.mxu0 0.0
    %545 = vmatprep.subr.mxu0 0.0
    %546 = vmatpush1.msra.mxu0 0.0
    %547 = vmatprep.subr.mxu0 0.0
    %548 = vmatpush1.msra.mxu0 0.0
    %549 = vmatprep.subr.mxu0 0.0
    %550 = vmatpush1.msra.mxu0 0.0
    %551 = vmatprep.subr.mxu0 0.0
    %552 = vmatpush1.msra.mxu0 0.0
    %553 = vmatprep.subr.mxu0 0.0
    %554 = vmatpush1.msra.mxu0 0.0
    %555 = vmatprep.mubr.f32.mxu0 0.0
    %556 = vmatmul.mubr.f32.gmra.mrb[0].mxu0 %v468
    %v557 = vpop.f32.mrb[0].mxu0
    %v558 = vadd.f32 0.0, %v557
    %v559 = vpop.f32.mrb[0].mxu0
    %560 = vmatprep.mubr.f32.mxu0 0.0
    %561 = vmatmul.mubr.f32.gmra.mrb[0].mxu0 %v471
    %v562 = vpop.f32.mrb[0].mxu0
    %v563 = vadd.f32 0.0, %v562
    %v564 = vpop.f32.mrb[0].mxu0
    %565 = vmatprep.mubr.f32.mxu0 0.0
    %566 = vmatmul.mubr.f32.gmra.mrb[0].mxu0 %v474
    %v567 = vpop.f32.mrb[0].mxu0
    %v568 = vadd.f32 0.0, %v567
    %v569 = vpop.f32.mrb[0].mxu0
    %570 = vmatprep.mubr.f32.mxu0 0.0
    %571 = vmatmul.mubr.f32.gmra.mrb[0].mxu0 %v477
    %v572 = vpop.f32.mrb[0].mxu0
    %v573 = vadd.f32 0.0, %v572
    %v574 = vpop.f32.mrb[0].mxu0
    %575 = vmatprep.mubr.f32.mxu0 0.0
    %576 = vmatmul.mubr.f32.gmra.mrb[0].mxu0 %v480
    %v577 = vpop.f32.mrb[0].mxu0
    %v578 = vadd.f32 0.0, %v577
    %v579 = vpop.f32.mrb[0].mxu0
    %580 = vmatprep.mubr.f32.mxu0 0.0
    %581 = vmatmul.mubr.f32.gmra.mrb[0].mxu0 %v483
    %v582 = vpop.f32.mrb[0].mxu0
    %v583 = vadd.f32 0.0, %v582
    %v584 = vpop.f32.mrb[0].mxu0
    %585 = vmatprep.mubr.f32.mxu0 0.0
    %586 = vmatmul.mubr.f32.gmra.mrb[0].mxu0 %v486
    %v587 = vpop.f32.mrb[0].mxu0
    %v588 = vadd.f32 0.0, %v587
    %v589 = vpop.f32.mrb[0].mxu0
    %590 = vmatprep.mubr.f32.mxu0 0.0
    %591 = vmatmul.mubr.f32.gmra.mrb[0].mxu0 %v489
    %v592 = vpop.f32.mrb[0].mxu0
    %v593 = vadd.f32 0.0, %v592
    %v594 = vpop.f32.mrb[0].mxu0
    %595 = vdwg.mxu0
    %v596 = vsel %vm24, %v558, -inf
    %v597 = vsel %vm24, %v568, -inf
    %v598 = vsel %vm24, %v578, -inf
    %v599 = vmax.f32 %v596, %v598
    %v600 = vsel %vm24, %v588, -inf
    %v601 = vmax.f32 %v597, %v600
    %v602 = vmax.f32 %v599, %v601
    %v603 = vsel %vm24, %v563, -inf
    %v604 = vsel %vm24, %v573, -inf
    %v605 = vsel %vm24, %v583, -inf
    %v606 = vmax.f32 %v603, %v605
    %v607 = vsel %vm24, %v593, -inf
    %v608 = vmax.f32 %v604, %v607
    %v609 = vmax.f32 %v606, %v608
    %v610 = vsub.f32 %v558, %v602
    %v611 = vsub.f32 %v563, %v609
    %v612 = vsub.f32 %v568, %v602
    %v613 = vsub.f32 %v573, %v609
    %v614 = vsub.f32 %v578, %v602
    %v615 = vsub.f32 %v583, %v609
    %v616 = vsub.f32 %v588, %v602
    %v617 = vsub.f32 %v593, %v609
    %v618 = vmul.f32 %v610, 1.442695
    %v619 = vpow.pop %v618
    %v620 = vmul.f32 %v611, 1.442695
    %v621 = vpow.pop %v620
    %v622 = vmul.f32 %v612, 1.442695
    %v623 = vpow.pop %v622
    %v624 = vmul.f32 %v613, 1.442695
    %v625 = vpow.pop %v624
    %v626 = vmul.f32 %v614, 1.442695
    %v627 = vpow.pop %v626
    %v628 = vmul.f32 %v615, 1.442695
    %v629 = vpow.pop %v628
    %v630 = vmul.f32 %v616, 1.442695
    %v631 = vpow.pop %v630
    %v632 = vmul.f32 %v617, 1.442695
    %v633 = vpow.pop %v632
    %v634 = vsel %vm24, %v619, 0.0
    %v635 = vsel %vm24, %v623, 0.0
    %v636 = vadd.f32 %v634, %v635
    %v637 = vsel %vm24, %v627, 0.0
    %v638 = vadd.f32 %v636, %v637
    %v639 = vsel %vm24, %v631, 0.0
    %v640 = vadd.f32 %v638, %v639
    %v641 = vsel %vm24, %v621, 0.0
    %v642 = vsel %vm24, %v625, 0.0
    %v643 = vadd.f32 %v641, %v642
    %v644 = vsel %vm24, %v629, 0.0
    %v645 = vadd.f32 %v643, %v644
    %v646 = vsel %vm24, %v633, 0.0
    %v647 = vadd.f32 %v645, %v646
    %v648 = vrcp.pop %v640
    %v649 = vmul.f32 %v619, %v648
    %v650 = vrcp.pop %v647
    %v651 = vmul.f32 %v621, %v650
    %v652 = vmul.f32 %v623, %v648
    %v653 = vmul.f32 %v625, %v650
    %v654 = vmul.f32 %v627, %v648
    %v655 = vmul.f32 %v629, %v650
    %v656 = vmul.f32 %v631, %v648
    %v657 = vmul.f32 %v633, %v650
    %v658 = vmul.f32 %v649, %v363
    %v659 = vmul.f32 %v651, %v364
    %v660 = vmul.f32 %v652, %v365
    %v661 = vmul.f32 %v653, %v366
    %v662 = vmul.f32 %v654, %v367
    %v663 = vmul.f32 %v655, %v368
    %v664 = vmul.f32 %v656, %v369
    %v665 = vmul.f32 %v657, %v370
    %v666 = vsel %vm24, %v658, 0.0
    %v667 = vsel %vm24, %v660, 0.0
    %v668 = vadd.f32 %v666, %v667
    %v669 = vsel %vm24, %v662, 0.0
    %v670 = vadd.f32 %v668, %v669
    %v671 = vsel %vm24, %v664, 0.0
    %v672 = vadd.f32 %v670, %v671
    %v673 = vsel %vm24, %v659, 0.0
    %v674 = vsel %vm24, %v661, 0.0
    %v675 = vadd.f32 %v673, %v674
    %v676 = vsel %vm24, %v663, 0.0
    %v677 = vadd.f32 %v675, %v676
    %v678 = vsel %vm24, %v665, 0.0
    %v679 = vadd.f32 %v677, %v678
    %v680 = vld [vmem:[%s1 + $0x80] sm:$0xff]
    %v681 = vld [vmem:[%s1 + $0x88] sm:$0xff]
    %v682 = vld [vmem:[%s1 + $0x90] sm:$0xff]
    %v683 = vld [vmem:[%s1 + $0x98] sm:$0xff]
    %v684 = vld [vmem:[%s1 + $0xa9] sm:$0x1]
    %v685 = vlaneseq
    %v686 = vshrl.u32 %v685, 7
    %v687 = vsub.s32 0, %v686
    %v688 = vrot.slane %v684, %v687
    %v690 = vsel %vm24, %v672, 0
    %v693 = vsel %vm24, %v679, 0
    %695 = vmatprep.subr.mxu0 0.0
    %696 = vmatpush1.msra.mxu0 %v680
    %697 = vmatprep.subr.mxu0 0.0
    %698 = vmatpush1.msra.mxu0 %v681
    %699 = vmatprep.subr.mxu0 0.0
    %700 = vmatpush1.msra.mxu0 %v682
    %701 = vmatprep.subr.mxu0 0.0
    %702 = vmatpush1.msra.mxu0 %v683
    %703 = vmatprep.subr.mxu0 0.0
    %704 = vmatpush1.msra.mxu0 0.0
    %705 = vmatprep.subr.mxu0 0.0
    %706 = vmatpush1.msra.mxu0 0.0
    %707 = vmatprep.subr.mxu0 0.0
    %708 = vmatpush1.msra.mxu0 0.0
    %709 = vmatprep.subr.mxu0 0.0
    %710 = vmatpush1.msra.mxu0 0.0
    %711 = vmatprep.subr.mxu0 0.0
    %712 = vmatpush1.msra.mxu0 0.0
    %713 = vmatprep.subr.mxu0 0.0
    %714 = vmatpush1.msra.mxu0 0.0
    %715 = vmatprep.subr.mxu0 0.0
    %716 = vmatpush1.msra.mxu0 0.0
    %717 = vmatprep.subr.mxu0 0.0
    %718 = vmatpush1.msra.mxu0 0.0
    %719 = vmatprep.subr.mxu0 0.0
    %720 = vmatpush1.msra.mxu0 0.0
    %721 = vmatprep.subr.mxu0 0.0
    %722 = vmatpush1.msra.mxu0 0.0
    %723 = vmatprep.subr.mxu0 0.0
    %724 = vmatpush1.msra.mxu0 0.0
    %725 = vmatprep.subr.mxu0 0.0
    %726 = vmatpush1.msra.mxu0 0.0
    %727 = vmatprep.subr.mxu0 0.0
    %728 = vmatpush1.msra.mxu0 0.0
    %729 = vmatprep.subr.mxu0 0.0
    %730 = vmatpush1.msra.mxu0 0.0
    %731 = vmatprep.subr.mxu0 0.0
    %732 = vmatpush1.msra.mxu0 0.0
    %733 = vmatprep.subr.mxu0 0.0
    %734 = vmatpush1.msra.mxu0 0.0
    %735 = vmatprep.subr.mxu0 0.0
    %736 = vmatpush1.msra.mxu0 0.0
    %737 = vmatprep.subr.mxu0 0.0
    %738 = vmatpush1.msra.mxu0 0.0
    %739 = vmatprep.subr.mxu0 0.0
    %740 = vmatpush1.msra.mxu0 0.0
    %741 = vmatprep.subr.mxu0 0.0
    %742 = vmatpush1.msra.mxu0 0.0
    %743 = vmatprep.subr.mxu0 0.0
    %744 = vmatpush1.msra.mxu0 0.0
    %745 = vmatprep.subr.mxu0 0.0
    %746 = vmatpush1.msra.mxu0 0.0
    %747 = vmatprep.subr.mxu0 0.0
    %748 = vmatpush1.msra.mxu0 0.0
    %749 = vmatprep.subr.mxu0 0.0
    %750 = vmatpush1.msra.mxu0 0.0
    %751 = vmatprep.subr.mxu0 0.0
    %752 = vmatpush1.msra.mxu0 0.0
    %753 = vmatprep.subr.mxu0 0.0
    %754 = vmatpush1.msra.mxu0 0.0
    %755 = vmatprep.subr.mxu0 0.0
    %756 = vmatpush1.msra.mxu0 0.0
    %757 = vmatprep.subr.mxu0 0.0
    %758 = vmatpush1.msra.mxu0 0.0
    %759 = vmatprep.mubr.f32.mxu0 0.0
    %760 = vmatmul.mubr.f32.gmra.mrb[0].mxu0 %v690
    %v761 = vpop.f32.mrb[0].mxu0
    %v762 = vadd.f32 %v688, %v761
    %v763 = vpop.f32.mrb[0].mxu0
    %764 = vmatprep.mubr.f32.mxu0 0.0
    %765 = vmatmul.mubr.f32.gmra.mrb[0].mxu0 %v693
    %v766 = vpop.f32.mrb[0].mxu0
    %v767 = vadd.f32 %v688, %v766
    %v768 = vpop.f32.mrb[0].mxu0
    %769 = vdwg.mxu0
    %v770 = vsel %vm24, %v762, 0.0
    %771 = vadd.xlane.f32.xlu0 %v770
    %v772 = vpop.xlane.xlu0 %771
    %v773 = vsel %vm24, %v767, 0.0
    %774 = vadd.xlane.f32.xlu0 %v773
    %v775 = vpop.xlane.xlu0 %774
    %v776 = vrcp.pop 32.0
    %v777 = vmul.f32 %v772, %v776
    %v778 = vmul.f32 %v775, %v776
    %v779 = vsub.f32 %v762, %v777
    %v780 = vsub.f32 %v767, %v778
    %v781 = vmul.f32 %v779, %v779
    %v782 = vmul.f32 %v780, %v780
    %v783 = vsel %vm24, %v781, 0.0
    %784 = vadd.xlane.f32.xlu0 %v783
    %v785 = vpop.xlane.xlu0 %784
    %v786 = vsel %vm24, %v782, 0.0
    %787 = vadd.xlane.f32.xlu0 %v786
    %v788 = vpop.xlane.xlu0 %787
    %v789 = vmul.f32 %v785, %v776
    %v790 = vmul.f32 %v788, %v776
    %v791 = vadd.f32 %v789, 1e-05
    %v792 = vadd.f32 %v790, 1e-05
    %v793 = vrsqrt.pop %v791
    %v794 = vrsqrt.pop %v792
    %v795 = vmul.f32 %v779, %v793
    %v796 = vmul.f32 %v780, %v794
    %v797 = vld [vmem:[%s1 + $0xaa] sm:$0x1]
    %v798 = vlaneseq
    %v799 = vshrl.u32 %v798, 7
    %v800 = vsub.s32 0, %v799
    %v801 = vrot.slane %v797, %v800
    %v802 = vmul.f32 %v795, %v801
    %v803 = vmul.f32 %v796, %v801
    %v804 = vld [vmem:[%s1 + $0xab] sm:$0x1]
    %v805 = vlaneseq
    %v806 = vshrl.u32 %v805, 7
    %v807 = vsub.s32 0, %v806
    %v808 = vrot.slane %v804, %v807
    %v809 = vadd.f32 %v802, %v808
    %v810 = vadd.f32 %v803, %v808
    %811 = vst.msk [vmem:[#allocation2] sm:$0xff] %vm24, %v809
    %812 = vst.msk [vmem:[#allocation2 + $0x8] sm:$0xff] %vm24, %v810
    // Predicated region
    $region10: #{tpu_custom_call.1} parent=1 // pred_check
      _
    $region11: #{tpu_custom_call.1} parent=1 // pred_check_branch
      %814 = sbr.rel (0) target = $region13
    $region12: #{tpu_custom_call.1} parent=1 // pred_region
      %s816 = ssub.s32 256, 256
      %817 = vsyncadd [#allocation3], %s816
      %s818 = sshll.u32 [#allocation2], 4
      %s819 = int_to_ptr.vmem [resolvable:$true] %s818
      %824 = dma.vmem_to_hbm [thread:$0]  %s819, 256, %s2, [#allocation3], 128, 128, 8
    $region13: #{tpu_custom_call.1} parent=1 // pred_fallthru
      _
    // Predicated region
    $region14: #{tpu_custom_call.1} parent=1 // pred_check
      _
    $region15: #{tpu_custom_call.1} parent=1 // pred_check_branch
      %826 = sbr.rel (0) target = $region17
    $region16: #{tpu_custom_call.1} parent=1 // pred_region
      %827 = dma.done [#allocation3], 256
    $region17: #{tpu_custom_call.1} parent=1 // pred_fallthru
      _
    %828 = vsyncpa [#allocation3], 1

</llo_original>
